<compile_context>
chip_gen: v6e
topology: v6e:2x2x1
jax: 0.10.0
libtpu: 0.0.40
codegen_flags: <defaults>
</compile_context>

<pallas_src>
import functools
import math

import jax
import jax.numpy as jnp
from jax import lax
from jax.experimental import pallas as pl
from jax.experimental.pallas import tpu as pltpu


def _mhsa_kernel(x_ref, wq_ref, bq_ref, wk_ref, bk_ref, wv_ref, bv_ref,
                 wo_ref, bo_ref, o_ref, k_scratch, v_scratch, *,
                 num_heads, per_head_dim, hidden_dim, tq):
    nh, d, H = num_heads, per_head_dim, hidden_dim
    t = pl.program_id(1)

    # ---- K/V projection: once per batch element (first query tile only). ----
    @pl.when(t == 0)
    def _project_kv():
        x_full = x_ref[0]                                          # (S, H) bf16
        for h in range(nh):                                        # static unroll
            kh = jnp.dot(x_full, wk_ref[h],
                         preferred_element_type=jnp.float32) + bk_ref[h]
            vh = jnp.dot(x_full, wv_ref[h],
                         preferred_element_type=jnp.float32) + bv_ref[h]
            k_scratch[h] = kh.astype(jnp.bfloat16)                 # (S, d)
            v_scratch[h] = vh.astype(jnp.bfloat16)                 # (S, d)

    # ---- Query tile sliced from the resident full-sequence block. ----------
    q_start = pl.multiple_of(t * tq, tq)
    xq = x_ref[0, pl.ds(q_start, tq), :]                           # (TQ, H) bf16

    # f32 output accumulator replaces the (TQ, H) ctx scratch + concatenate.
    out = jnp.zeros((tq, H), jnp.float32)

    for h in range(nh):                                            # static unroll
        # Q projection of this head (1/sqrt(d) folded into wq/bq wrapper-side).
        qh = (jnp.dot(xq, wq_ref[h], preferred_element_type=jnp.float32)
              + bq_ref[h]).astype(jnp.bfloat16)                    # (TQ, d)
        kh = k_scratch[h]                                          # (S, d) bf16
        vh = v_scratch[h]                                          # (S, d) bf16

        # Contract on d of both operands -> no explicit (d, S) transpose.
        s = lax.dot_general(qh, kh, (((1,), (1,)), ((), ())),
                            preferred_element_type=jnp.float32)    # (TQ, S)

        # Numerically-stable softmax along keys, elementwise math kept in f32.
        m = jnp.max(s, axis=-1, keepdims=True)
        p = jnp.exp(s - m)
        p = p * pl.reciprocal(jnp.sum(p, axis=-1, keepdims=True), approx=True)

        ctx = jnp.dot(p.astype(jnp.bfloat16), vh,
                      preferred_element_type=jnp.float32)          # (TQ, d)
        # Fold this head's slice of the output projection straight into `out`.
        out = out + jnp.dot(ctx.astype(jnp.bfloat16), wo_ref[h],
                            preferred_element_type=jnp.float32)    # (TQ, H)

    o_ref[0] = (out + bo_ref[...]).astype(o_ref.dtype)


def multi_head_self_attention(x, params, *, num_heads, tq=None):
    """x: (B, S, H) float32. params: (in, out) f32 weights, (1, out) biases."""
    B, S, H = x.shape
    assert H % num_heads == 0
    d = H // num_heads

    # Query-sequence tile (exact softmax over all S keys regardless of tq).
    if tq is None:
        if S % 256 == 0 and S >= 512:
            tq = 256                       # v6e/v7x: better MXU fill per push
        elif S % 128 == 0 and S > 128:
            tq = 128
        else:
            tq = S
    assert S % tq == 0, "sequence length must be divisible by the query tile"
    n_tq = S // tq
    # TODO(synk): for B == 1 on v7x, a head- or batch-parallel split would be
    # needed to occupy both TensorCores (t is 'arbitrary' due to K/V carry).

    # One-time wrapper-side prep: head-major weight split (lane-dense per-head
    # matmuls in-kernel), 1/sqrt(d) folded into Wq/bq, bf16 matmul operands.
    scale = 1.0 / math.sqrt(d)

    def head_w(w):   # (H, H)=(in, nh*d) -> (nh, H, d)
        return jnp.transpose(w.reshape(H, num_heads, d), (1, 0, 2))

    def head_b(b):   # (1, nh*d) -> (nh, 1, d)
        return jnp.transpose(b.reshape(1, num_heads, d), (1, 0, 2))

    wq = (head_w(params["wq"]) * scale).astype(jnp.bfloat16)
    bq = (head_b(params["bq"]) * scale).astype(jnp.float32)
    wk = head_w(params["wk"]).astype(jnp.bfloat16)
    bk = head_b(params["bk"]).astype(jnp.float32)
    wv = head_w(params["wv"]).astype(jnp.bfloat16)
    bv = head_b(params["bv"]).astype(jnp.float32)
    wo = params["wo"].reshape(num_heads, d, H).astype(jnp.bfloat16)  # (nh, d, H)
    bo = params["bo"].astype(jnp.float32)
    xb = x.astype(jnp.bfloat16)            # halve HBM->VMEM DMA bytes

    # VMEM footprint estimate -> explicit limit, capped at v7x physical 64 MiB.
    vmem_est = (
        2 * S * H * 2            # x full-seq block (bf16, double-buffered)
        + 2 * S * H * 2          # K + V head-major bf16 scratch
        + 2 * tq * H * 4         # output tile (f32, double-buffered)
        + 2 * 4 * H * H * 2      # Wq/Wk/Wv/Wo bf16 (assume 2x buffered)
        + 4 * tq * S * 4         # per-head score / softmax f32 intermediates
        + (1 << 20)              # biases + slack
    )
    vmem_limit = int(min(max(2 * vmem_est, 8 << 20), 64 << 20))

    kernel = functools.partial(_mhsa_kernel, num_heads=num_heads,
                               per_head_dim=d, hidden_dim=H, tq=tq)

    return pl.pallas_call(
        kernel,
        out_shape=jax.ShapeDtypeStruct((B, S, H), x.dtype),
        grid_spec=pltpu.PrefetchScalarGridSpec(
            num_scalar_prefetch=0,
            grid=(B, n_tq),
            in_specs=[
                # Full sequence for this batch element; index_map constant over
                # t -> DMA'd once per b, query tile sliced in-kernel.
                pl.BlockSpec((1, S, H), lambda b, t: (b, 0, 0)),
                pl.BlockSpec((num_heads, H, d), lambda b, t: (0, 0, 0)),  # Wq
                pl.BlockSpec((num_heads, 1, d), lambda b, t: (0, 0, 0)),  # bq
                pl.BlockSpec((num_heads, H, d), lambda b, t: (0, 0, 0)),  # Wk
                pl.BlockSpec((num_heads, 1, d), lambda b, t: (0, 0, 0)),  # bk
                pl.BlockSpec((num_heads, H, d), lambda b, t: (0, 0, 0)),  # Wv
                pl.BlockSpec((num_heads, 1, d), lambda b, t: (0, 0, 0)),  # bv
                pl.BlockSpec((num_heads, d, H), lambda b, t: (0, 0, 0)),  # Wo
                pl.BlockSpec((1, H), lambda b, t: (0, 0)),                # bo
            ],
            out_specs=pl.BlockSpec((1, tq, H), lambda b, t: (b, t, 0)),
            scratch_shapes=[
                pltpu.VMEM((num_heads, S, d), jnp.bfloat16),   # K (head-major)
                pltpu.VMEM((num_heads, S, d), jnp.bfloat16),   # V (head-major)
            ]),
        compiler_params=pltpu.CompilerParams(
            dimension_semantics=("parallel", "arbitrary"),
            vmem_limit_bytes=vmem_limit),
    )(xb, wq, bq, wk, bk, wv, bv, wo, bo)


def _reference(x, params, num_heads):
    """Plain-JAX f32 reference mirroring the PyTorch forward (eval mode)."""
    B, S, H = x.shape
    d = H // num_heads

    def lin(t, w, b):
        return t @ w + b

    def split_heads(t):  # (B,S,H) -> (B,heads,S,d)
        return t.reshape(B, S, num_heads, d).transpose(0, 2, 1, 3)

    q = split_heads(lin(x, params["wq"], params["bq"]))
    k = split_heads(lin(x, params["wk"], params["bk"]))
    v = split_heads(lin(x, params["wv"], params["bv"]))

    scores = jnp.einsum("bhqd,bhkd->bhqk", q, k) / math.sqrt(d)
    attn = jax.nn.softmax(scores, axis=-1)
    ctx = jnp.einsum("bhqk,bhkd->bhqd", attn, v)
    ctx = ctx.transpose(0, 2, 1, 3).reshape(B, S, H)
    return lin(ctx, params["wo"], params["bo"])


if __name__ == "__main__":
    B, S, H = 2, 8, 32
    num_heads = 4

    key = jax.random.PRNGKey(0)
    kx, kq, kk, kv, ko, kbq, kbk, kbv, kbo = jax.random.split(key, 9)

    # torch.nn.Linear-like init; weights stored pre-transposed as (in, out),
    # biases as (1, out).
    scale = 1.0 / math.sqrt(H)
    params = {
        "wq": jax.random.uniform(kq, (H, H), jnp.float32, -scale, scale),
        "wk": jax.random.uniform(kk, (H, H), jnp.float32, -scale, scale),
        "wv": jax.random.uniform(kv, (H, H), jnp.float32, -scale, scale),
        "wo": jax.random.uniform(ko, (H, H), jnp.float32, -scale, scale),
        "bq": jax.random.uniform(kbq, (1, H), jnp.float32, -scale, scale),
        "bk": jax.random.uniform(kbk, (1, H), jnp.float32, -scale, scale),
        "bv": jax.random.uniform(kbv, (1, H), jnp.float32, -scale, scale),
        "bo": jax.random.uniform(kbo, (1, H), jnp.float32, -scale, scale),
    }

    x = jax.random.normal(kx, (B, S, H), jnp.float32)

    out = multi_head_self_attention(x, params, num_heads=num_heads)
    out = jax.block_until_ready(out)

    ref = _reference(x, params, num_heads)
    assert out.shape == (B, S, H)
    # bf16 inputs + approx reciprocal -> ~1e-2-level tolerance vs f32 ref.
    assert jnp.allclose(out, ref, atol=2e-2, rtol=2e-2), "mismatch vs reference"

    print("KERNEL_OK")
</pallas_src>

<mosaic_0001>
module attributes {stable_mosaic.version = 11 : i64} {
  func.func @_mhsa_kernel(%arg0: i32, %arg1: i32, %arg2: memref<1x8x32xbf16, #tpu.memory_space<vmem>>, %arg3: memref<4x32x8xbf16, #tpu.memory_space<vmem>>, %arg4: memref<4x1x8xf32, #tpu.memory_space<vmem>>, %arg5: memref<4x32x8xbf16, #tpu.memory_space<vmem>>, %arg6: memref<4x1x8xf32, #tpu.memory_space<vmem>>, %arg7: memref<4x32x8xbf16, #tpu.memory_space<vmem>>, %arg8: memref<4x1x8xf32, #tpu.memory_space<vmem>>, %arg9: memref<4x8x32xbf16, #tpu.memory_space<vmem>>, %arg10: memref<1x32xf32, #tpu.memory_space<vmem>>, %arg11: memref<1x8x32xf32, #tpu.memory_space<vmem>>, %arg12: memref<4x8x8xbf16, #tpu.memory_space<vmem>>, %arg13: memref<4x8x8xbf16, #tpu.memory_space<vmem>>) attributes {dimension_semantics = [#tpu.dimension_semantics<parallel>, #tpu.dimension_semantics<arbitrary>], iteration_bounds = array<i64: 2, 1>, scalar_prefetch = 0 : i64, scratch_operands = 2 : i64, tpu.core_type = #tpu.core_type<tc>, window_params = [{transform_indices = @transform_0, window_bounds = array<i64: 1, 8, 32>}, {pipeline_mode = #tpu.pipeline_mode<synchronous>, transform_indices = @transform_1, window_bounds = array<i64: 4, 32, 8>}, {pipeline_mode = #tpu.pipeline_mode<synchronous>, transform_indices = @transform_2, window_bounds = array<i64: 4, 1, 8>}, {pipeline_mode = #tpu.pipeline_mode<synchronous>, transform_indices = @transform_3, window_bounds = array<i64: 4, 32, 8>}, {pipeline_mode = #tpu.pipeline_mode<synchronous>, transform_indices = @transform_4, window_bounds = array<i64: 4, 1, 8>}, {pipeline_mode = #tpu.pipeline_mode<synchronous>, transform_indices = @transform_5, window_bounds = array<i64: 4, 32, 8>}, {pipeline_mode = #tpu.pipeline_mode<synchronous>, transform_indices = @transform_6, window_bounds = array<i64: 4, 1, 8>}, {pipeline_mode = #tpu.pipeline_mode<synchronous>, transform_indices = @transform_7, window_bounds = array<i64: 4, 8, 32>}, {pipeline_mode = #tpu.pipeline_mode<synchronous>, transform_indices = @transform_8, window_bounds = array<i64: 1, 32>}, {transform_indices = @transform_9, window_bounds = array<i64: 1, 8, 32>}]} {
    %c0_i32 = arith.constant 0 : i32
    %0 = arith.cmpi eq, %arg1, %c0_i32 : i32
    %1 = arith.extui %0 : i1 to i32
    %c0_i32_0 = arith.constant 0 : i32
    %2 = arith.cmpi ne, %1, %c0_i32_0 : i32
    scf.if %2 {
      %c0_88 = arith.constant 0 : index
      %c0_89 = arith.constant 0 : index
      %c0_90 = arith.constant 0 : index
      %135 = vector.load %arg2[%c0_88, %c0_89, %c0_90] : memref<1x8x32xbf16, #tpu.memory_space<vmem>>, vector<1x8x32xbf16>
      %136 = vector.shape_cast %135 : vector<1x8x32xbf16> to vector<8x32xbf16>
      %c0_91 = arith.constant 0 : index
      %c0_92 = arith.constant 0 : index
      %c0_93 = arith.constant 0 : index
      %137 = vector.load %arg5[%c0_91, %c0_92, %c0_93] : memref<4x32x8xbf16, #tpu.memory_space<vmem>>, vector<1x32x8xbf16>
      %138 = vector.shape_cast %137 : vector<1x32x8xbf16> to vector<32x8xbf16>
      %cst_94 = arith.constant dense<0.000000e+00> : vector<8x8xf32>
      %139 = tpu.matmul %136, %138, %cst_94 {dimension_numbers = #tpu.dot_dimension_numbers<[1], [0], [0], [1], [0, 0, 1, 1], [], []>} : vector<8x32xbf16>, vector<32x8xbf16>, vector<8x8xf32> -> vector<8x8xf32>
      %c0_95 = arith.constant 0 : index
      %c0_96 = arith.constant 0 : index
      %c0_97 = arith.constant 0 : index
      %140 = vector.load %arg6[%c0_95, %c0_96, %c0_97] : memref<4x1x8xf32, #tpu.memory_space<vmem>>, vector<1x1x8xf32>
      %141 = vector.shape_cast %140 : vector<1x1x8xf32> to vector<1x8xf32>
      %142 = vector.broadcast %141 : vector<1x8xf32> to vector<8x8xf32>
      %143 = arith.addf %139, %142 : vector<8x8xf32>
      %c0_98 = arith.constant 0 : index
      %c0_99 = arith.constant 0 : index
      %c0_100 = arith.constant 0 : index
      %144 = vector.load %arg7[%c0_98, %c0_99, %c0_100] : memref<4x32x8xbf16, #tpu.memory_space<vmem>>, vector<1x32x8xbf16>
      %145 = vector.shape_cast %144 : vector<1x32x8xbf16> to vector<32x8xbf16>
      %cst_101 = arith.constant dense<0.000000e+00> : vector<8x8xf32>
      %146 = tpu.matmul %136, %145, %cst_101 {dimension_numbers = #tpu.dot_dimension_numbers<[1], [0], [0], [1], [0, 0, 1, 1], [], []>} : vector<8x32xbf16>, vector<32x8xbf16>, vector<8x8xf32> -> vector<8x8xf32>
      %c0_102 = arith.constant 0 : index
      %c0_103 = arith.constant 0 : index
      %c0_104 = arith.constant 0 : index
      %147 = vector.load %arg8[%c0_102, %c0_103, %c0_104] : memref<4x1x8xf32, #tpu.memory_space<vmem>>, vector<1x1x8xf32>
      %148 = vector.shape_cast %147 : vector<1x1x8xf32> to vector<1x8xf32>
      %149 = vector.broadcast %148 : vector<1x8xf32> to vector<8x8xf32>
      %150 = arith.addf %146, %149 : vector<8x8xf32>
      %151 = arith.truncf %143 : vector<8x8xf32> to vector<8x8xbf16>
      %c0_105 = arith.constant 0 : index
      %c0_106 = arith.constant 0 : index
      %c0_107 = arith.constant 0 : index
      %152 = vector.load %arg12[%c0_105, %c0_106, %c0_107] : memref<4x8x8xbf16, #tpu.memory_space<vmem>>, vector<1x8x8xbf16>
      %153 = vector.shape_cast %152 : vector<1x8x8xbf16> to vector<8x8xbf16>
      %154 = vector.shape_cast %151 : vector<8x8xbf16> to vector<1x8x8xbf16>
      tpu.vector_store %arg12[%c0_105, %c0_106, %c0_107], %154 {strides = array<i32>} : memref<4x8x8xbf16, #tpu.memory_space<vmem>>, vector<1x8x8xbf16>,
      %155 = arith.truncf %150 : vector<8x8xf32> to vector<8x8xbf16>
      %c0_108 = arith.constant 0 : index
      %c0_109 = arith.constant 0 : index
      %c0_110 = arith.constant 0 : index
      %156 = vector.load %arg13[%c0_108, %c0_109, %c0_110] : memref<4x8x8xbf16, #tpu.memory_space<vmem>>, vector<1x8x8xbf16>
      %157 = vector.shape_cast %156 : vector<1x8x8xbf16> to vector<8x8xbf16>
      %158 = vector.shape_cast %155 : vector<8x8xbf16> to vector<1x8x8xbf16>
      tpu.vector_store %arg13[%c0_108, %c0_109, %c0_110], %158 {strides = array<i32>} : memref<4x8x8xbf16, #tpu.memory_space<vmem>>, vector<1x8x8xbf16>,
      %c1_111 = arith.constant 1 : index
      %c0_112 = arith.constant 0 : index
      %c0_113 = arith.constant 0 : index
      %159 = vector.load %arg5[%c1_111, %c0_112, %c0_113] : memref<4x32x8xbf16, #tpu.memory_space<vmem>>, vector<1x32x8xbf16>
      %160 = vector.shape_cast %159 : vector<1x32x8xbf16> to vector<32x8xbf16>
      %cst_114 = arith.constant dense<0.000000e+00> : vector<8x8xf32>
      %161 = tpu.matmul %136, %160, %cst_114 {dimension_numbers = #tpu.dot_dimension_numbers<[1], [0], [0], [1], [0, 0, 1, 1], [], []>} : vector<8x32xbf16>, vector<32x8xbf16>, vector<8x8xf32> -> vector<8x8xf32>
      %c1_115 = arith.constant 1 : index
      %c0_116 = arith.constant 0 : index
      %c0_117 = arith.constant 0 : index
      %162 = vector.load %arg6[%c1_115, %c0_116, %c0_117] : memref<4x1x8xf32, #tpu.memory_space<vmem>>, vector<1x1x8xf32>
      %163 = vector.shape_cast %162 : vector<1x1x8xf32> to vector<1x8xf32>
      %164 = vector.broadcast %163 : vector<1x8xf32> to vector<8x8xf32>
      %165 = arith.addf %161, %164 : vector<8x8xf32>
      %c1_118 = arith.constant 1 : index
      %c0_119 = arith.constant 0 : index
      %c0_120 = arith.constant 0 : index
      %166 = vector.load %arg7[%c1_118, %c0_119, %c0_120] : memref<4x32x8xbf16, #tpu.memory_space<vmem>>, vector<1x32x8xbf16>
      %167 = vector.shape_cast %166 : vector<1x32x8xbf16> to vector<32x8xbf16>
      %cst_121 = arith.constant dense<0.000000e+00> : vector<8x8xf32>
      %168 = tpu.matmul %136, %167, %cst_121 {dimension_numbers = #tpu.dot_dimension_numbers<[1], [0], [0], [1], [0, 0, 1, 1], [], []>} : vector<8x32xbf16>, vector<32x8xbf16>, vector<8x8xf32> -> vector<8x8xf32>
      %c1_122 = arith.constant 1 : index
      %c0_123 = arith.constant 0 : index
      %c0_124 = arith.constant 0 : index
      %169 = vector.load %arg8[%c1_122, %c0_123, %c0_124] : memref<4x1x8xf32, #tpu.memory_space<vmem>>, vector<1x1x8xf32>
      %170 = vector.shape_cast %169 : vector<1x1x8xf32> to vector<1x8xf32>
      %171 = vector.broadcast %170 : vector<1x8xf32> to vector<8x8xf32>
      %172 = arith.addf %168, %171 : vector<8x8xf32>
      %173 = arith.truncf %165 : vector<8x8xf32> to vector<8x8xbf16>
      %c1_125 = arith.constant 1 : index
      %c0_126 = arith.constant 0 : index
      %c0_127 = arith.constant 0 : index
      %174 = vector.load %arg12[%c1_125, %c0_126, %c0_127] : memref<4x8x8xbf16, #tpu.memory_space<vmem>>, vector<1x8x8xbf16>
      %175 = vector.shape_cast %174 : vector<1x8x8xbf16> to vector<8x8xbf16>
      %176 = vector.shape_cast %173 : vector<8x8xbf16> to vector<1x8x8xbf16>
      tpu.vector_store %arg12[%c1_125, %c0_126, %c0_127], %176 {strides = array<i32>} : memref<4x8x8xbf16, #tpu.memory_space<vmem>>, vector<1x8x8xbf16>,
      %177 = arith.truncf %172 : vector<8x8xf32> to vector<8x8xbf16>
      %c1_128 = arith.constant 1 : index
      %c0_129 = arith.constant 0 : index
      %c0_130 = arith.constant 0 : index
      %178 = vector.load %arg13[%c1_128, %c0_129, %c0_130] : memref<4x8x8xbf16, #tpu.memory_space<vmem>>, vector<1x8x8xbf16>
      %179 = vector.shape_cast %178 : vector<1x8x8xbf16> to vector<8x8xbf16>
      %180 = vector.shape_cast %177 : vector<8x8xbf16> to vector<1x8x8xbf16>
      tpu.vector_store %arg13[%c1_128, %c0_129, %c0_130], %180 {strides = array<i32>} : memref<4x8x8xbf16, #tpu.memory_space<vmem>>, vector<1x8x8xbf16>,
      %c2_131 = arith.constant 2 : index
      %c0_132 = arith.constant 0 : index
      %c0_133 = arith.constant 0 : index
      %181 = vector.load %arg5[%c2_131, %c0_132, %c0_133] : memref<4x32x8xbf16, #tpu.memory_space<vmem>>, vector<1x32x8xbf16>
      %182 = vector.shape_cast %181 : vector<1x32x8xbf16> to vector<32x8xbf16>
      %cst_134 = arith.constant dense<0.000000e+00> : vector<8x8xf32>
      %183 = tpu.matmul %136, %182, %cst_134 {dimension_numbers = #tpu.dot_dimension_numbers<[1], [0], [0], [1], [0, 0, 1, 1], [], []>} : vector<8x32xbf16>, vector<32x8xbf16>, vector<8x8xf32> -> vector<8x8xf32>
      %c2_135 = arith.constant 2 : index
      %c0_136 = arith.constant 0 : index
      %c0_137 = arith.constant 0 : index
      %184 = vector.load %arg6[%c2_135, %c0_136, %c0_137] : memref<4x1x8xf32, #tpu.memory_space<vmem>>, vector<1x1x8xf32>
      %185 = vector.shape_cast %184 : vector<1x1x8xf32> to vector<1x8xf32>
      %186 = vector.broadcast %185 : vector<1x8xf32> to vector<8x8xf32>
      %187 = arith.addf %183, %186 : vector<8x8xf32>
      %c2_138 = arith.constant 2 : index
      %c0_139 = arith.constant 0 : index
      %c0_140 = arith.constant 0 : index
      %188 = vector.load %arg7[%c2_138, %c0_139, %c0_140] : memref<4x32x8xbf16, #tpu.memory_space<vmem>>, vector<1x32x8xbf16>
      %189 = vector.shape_cast %188 : vector<1x32x8xbf16> to vector<32x8xbf16>
      %cst_141 = arith.constant dense<0.000000e+00> : vector<8x8xf32>
      %190 = tpu.matmul %136, %189, %cst_141 {dimension_numbers = #tpu.dot_dimension_numbers<[1], [0], [0], [1], [0, 0, 1, 1], [], []>} : vector<8x32xbf16>, vector<32x8xbf16>, vector<8x8xf32> -> vector<8x8xf32>
      %c2_142 = arith.constant 2 : index
      %c0_143 = arith.constant 0 : index
      %c0_144 = arith.constant 0 : index
      %191 = vector.load %arg8[%c2_142, %c0_143, %c0_144] : memref<4x1x8xf32, #tpu.memory_space<vmem>>, vector<1x1x8xf32>
      %192 = vector.shape_cast %191 : vector<1x1x8xf32> to vector<1x8xf32>
      %193 = vector.broadcast %192 : vector<1x8xf32> to vector<8x8xf32>
      %194 = arith.addf %190, %193 : vector<8x8xf32>
      %195 = arith.truncf %187 : vector<8x8xf32> to vector<8x8xbf16>
      %c2_145 = arith.constant 2 : index
      %c0_146 = arith.constant 0 : index
      %c0_147 = arith.constant 0 : index
      %196 = vector.load %arg12[%c2_145, %c0_146, %c0_147] : memref<4x8x8xbf16, #tpu.memory_space<vmem>>, vector<1x8x8xbf16>
      %197 = vector.shape_cast %196 : vector<1x8x8xbf16> to vector<8x8xbf16>
      %198 = vector.shape_cast %195 : vector<8x8xbf16> to vector<1x8x8xbf16>
      tpu.vector_store %arg12[%c2_145, %c0_146, %c0_147], %198 {strides = array<i32>} : memref<4x8x8xbf16, #tpu.memory_space<vmem>>, vector<1x8x8xbf16>,
      %199 = arith.truncf %194 : vector<8x8xf32> to vector<8x8xbf16>
      %c2_148 = arith.constant 2 : index
      %c0_149 = arith.constant 0 : index
      %c0_150 = arith.constant 0 : index
      %200 = vector.load %arg13[%c2_148, %c0_149, %c0_150] : memref<4x8x8xbf16, #tpu.memory_space<vmem>>, vector<1x8x8xbf16>
      %201 = vector.shape_cast %200 : vector<1x8x8xbf16> to vector<8x8xbf16>
      %202 = vector.shape_cast %199 : vector<8x8xbf16> to vector<1x8x8xbf16>
      tpu.vector_store %arg13[%c2_148, %c0_149, %c0_150], %202 {strides = array<i32>} : memref<4x8x8xbf16, #tpu.memory_space<vmem>>, vector<1x8x8xbf16>,
      %c3_151 = arith.constant 3 : index
      %c0_152 = arith.constant 0 : index
      %c0_153 = arith.constant 0 : index
      %203 = vector.load %arg5[%c3_151, %c0_152, %c0_153] : memref<4x32x8xbf16, #tpu.memory_space<vmem>>, vector<1x32x8xbf16>
      %204 = vector.shape_cast %203 : vector<1x32x8xbf16> to vector<32x8xbf16>
      %cst_154 = arith.constant dense<0.000000e+00> : vector<8x8xf32>
      %205 = tpu.matmul %136, %204, %cst_154 {dimension_numbers = #tpu.dot_dimension_numbers<[1], [0], [0], [1], [0, 0, 1, 1], [], []>} : vector<8x32xbf16>, vector<32x8xbf16>, vector<8x8xf32> -> vector<8x8xf32>
      %c3_155 = arith.constant 3 : index
      %c0_156 = arith.constant 0 : index
      %c0_157 = arith.constant 0 : index
      %206 = vector.load %arg6[%c3_155, %c0_156, %c0_157] : memref<4x1x8xf32, #tpu.memory_space<vmem>>, vector<1x1x8xf32>
      %207 = vector.shape_cast %206 : vector<1x1x8xf32> to vector<1x8xf32>
      %208 = vector.broadcast %207 : vector<1x8xf32> to vector<8x8xf32>
      %209 = arith.addf %205, %208 : vector<8x8xf32>
      %c3_158 = arith.constant 3 : index
      %c0_159 = arith.constant 0 : index
      %c0_160 = arith.constant 0 : index
      %210 = vector.load %arg7[%c3_158, %c0_159, %c0_160] : memref<4x32x8xbf16, #tpu.memory_space<vmem>>, vector<1x32x8xbf16>
      %211 = vector.shape_cast %210 : vector<1x32x8xbf16> to vector<32x8xbf16>
      %cst_161 = arith.constant dense<0.000000e+00> : vector<8x8xf32>
      %212 = tpu.matmul %136, %211, %cst_161 {dimension_numbers = #tpu.dot_dimension_numbers<[1], [0], [0], [1], [0, 0, 1, 1], [], []>} : vector<8x32xbf16>, vector<32x8xbf16>, vector<8x8xf32> -> vector<8x8xf32>
      %c3_162 = arith.constant 3 : index
      %c0_163 = arith.constant 0 : index
      %c0_164 = arith.constant 0 : index
      %213 = vector.load %arg8[%c3_162, %c0_163, %c0_164] : memref<4x1x8xf32, #tpu.memory_space<vmem>>, vector<1x1x8xf32>
      %214 = vector.shape_cast %213 : vector<1x1x8xf32> to vector<1x8xf32>
      %215 = vector.broadcast %214 : vector<1x8xf32> to vector<8x8xf32>
      %216 = arith.addf %212, %215 : vector<8x8xf32>
      %217 = arith.truncf %209 : vector<8x8xf32> to vector<8x8xbf16>
      %c3_165 = arith.constant 3 : index
      %c0_166 = arith.constant 0 : index
      %c0_167 = arith.constant 0 : index
      %218 = vector.load %arg12[%c3_165, %c0_166, %c0_167] : memref<4x8x8xbf16, #tpu.memory_space<vmem>>, vector<1x8x8xbf16>
      %219 = vector.shape_cast %218 : vector<1x8x8xbf16> to vector<8x8xbf16>
      %220 = vector.shape_cast %217 : vector<8x8xbf16> to vector<1x8x8xbf16>
      tpu.vector_store %arg12[%c3_165, %c0_166, %c0_167], %220 {strides = array<i32>} : memref<4x8x8xbf16, #tpu.memory_space<vmem>>, vector<1x8x8xbf16>,
      %221 = arith.truncf %216 : vector<8x8xf32> to vector<8x8xbf16>
      %c3_168 = arith.constant 3 : index
      %c0_169 = arith.constant 0 : index
      %c0_170 = arith.constant 0 : index
      %222 = vector.load %arg13[%c3_168, %c0_169, %c0_170] : memref<4x8x8xbf16, #tpu.memory_space<vmem>>, vector<1x8x8xbf16>
      %223 = vector.shape_cast %222 : vector<1x8x8xbf16> to vector<8x8xbf16>
      %224 = vector.shape_cast %221 : vector<8x8xbf16> to vector<1x8x8xbf16>
      tpu.vector_store %arg13[%c3_168, %c0_169, %c0_170], %224 {strides = array<i32>} : memref<4x8x8xbf16, #tpu.memory_space<vmem>>, vector<1x8x8xbf16>,
    } else {
    }
    %c8_i32 = arith.constant 8 : i32
    %3 = arith.muli %arg1, %c8_i32 : i32
    %4 = tpu.assume_multiple %3, 8 : i32
    %c0 = arith.constant 0 : index
    %5 = arith.index_cast %4 : i32 to index
    %c0_1 = arith.constant 0 : index
    %6 = vector.load %arg2[%c0, %5, %c0_1] : memref<1x8x32xbf16, #tpu.memory_space<vmem>>, vector<1x8x32xbf16>
    %7 = vector.shape_cast %6 : vector<1x8x32xbf16> to vector<8x32xbf16>
    %cst = arith.constant 0.000000e+00 : f32
    %8 = vector.broadcast %cst : f32 to vector<8x32xf32>
    %c0_2 = arith.constant 0 : index
    %c0_3 = arith.constant 0 : index
    %c0_4 = arith.constant 0 : index
    %9 = vector.load %arg3[%c0_2, %c0_3, %c0_4] : memref<4x32x8xbf16, #tpu.memory_space<vmem>>, vector<1x32x8xbf16>
    %10 = vector.shape_cast %9 : vector<1x32x8xbf16> to vector<32x8xbf16>
    %cst_5 = arith.constant dense<0.000000e+00> : vector<8x8xf32>
    %11 = tpu.matmul %7, %10, %cst_5 {dimension_numbers = #tpu.dot_dimension_numbers<[1], [0], [0], [1], [0, 0, 1, 1], [], []>} : vector<8x32xbf16>, vector<32x8xbf16>, vector<8x8xf32> -> vector<8x8xf32>
    %c0_6 = arith.constant 0 : index
    %c0_7 = arith.constant 0 : index
    %c0_8 = arith.constant 0 : index
    %12 = vector.load %arg4[%c0_6, %c0_7, %c0_8] : memref<4x1x8xf32, #tpu.memory_space<vmem>>, vector<1x1x8xf32>
    %13 = vector.shape_cast %12 : vector<1x1x8xf32> to vector<1x8xf32>
    %14 = vector.broadcast %13 : vector<1x8xf32> to vector<8x8xf32>
    %15 = arith.addf %11, %14 : vector<8x8xf32>
    %16 = arith.truncf %15 : vector<8x8xf32> to vector<8x8xbf16>
    %c0_9 = arith.constant 0 : index
    %c0_10 = arith.constant 0 : index
    %c0_11 = arith.constant 0 : index
    %17 = vector.load %arg12[%c0_9, %c0_10, %c0_11] : memref<4x8x8xbf16, #tpu.memory_space<vmem>>, vector<1x8x8xbf16>
    %18 = vector.shape_cast %17 : vector<1x8x8xbf16> to vector<8x8xbf16>
    %c0_12 = arith.constant 0 : index
    %c0_13 = arith.constant 0 : index
    %c0_14 = arith.constant 0 : index
    %19 = vector.load %arg13[%c0_12, %c0_13, %c0_14] : memref<4x8x8xbf16, #tpu.memory_space<vmem>>, vector<1x8x8xbf16>
    %20 = vector.shape_cast %19 : vector<1x8x8xbf16> to vector<8x8xbf16>
    %cst_15 = arith.constant dense<0.000000e+00> : vector<8x8xf32>
    %21 = tpu.matmul %16, %18, %cst_15 {dimension_numbers = #tpu.dot_dimension_numbers<[1], [1], [0], [0], [0, 0, 1, 0], [], []>} : vector<8x8xbf16>, vector<8x8xbf16>, vector<8x8xf32> -> vector<8x8xf32>
    %cst_16 = arith.constant dense<0xFF800000> : vector<8xf32>
    %22 = vector.multi_reduction <maximumf>, %21, %cst_16 [1] : vector<8x8xf32> to vector<8xf32>
    %23 = vector.shape_cast %22 : vector<8xf32> to vector<8x1xf32>
    %24 = vector.broadcast %23 : vector<8x1xf32> to vector<8x8xf32>
    %25 = arith.subf %21, %24 : vector<8x8xf32>
    %26 = math.exp %25 : vector<8x8xf32>
    %cst_17 = arith.constant dense<0.000000e+00> : vector<8xf32>
    %27 = vector.multi_reduction <add>, %26, %cst_17 [1] : vector<8x8xf32> to vector<8xf32>
    %28 = vector.shape_cast %27 : vector<8xf32> to vector<8x1xf32>
    %29 = tpu.reciprocal %28 {approx = true} : vector<8x1xf32> -> vector<8x1xf32>
    %30 = vector.broadcast %29 : vector<8x1xf32> to vector<8x8xf32>
    %31 = arith.mulf %26, %30 : vector<8x8xf32>
    %32 = arith.truncf %31 : vector<8x8xf32> to vector<8x8xbf16>
    %cst_18 = arith.constant dense<0.000000e+00> : vector<8x8xf32>
    %33 = tpu.matmul %32, %20, %cst_18 {dimension_numbers = #tpu.dot_dimension_numbers<[1], [0], [0], [1], [0, 0, 1, 1], [], []>} : vector<8x8xbf16>, vector<8x8xbf16>, vector<8x8xf32> -> vector<8x8xf32>
    %34 = arith.truncf %33 : vector<8x8xf32> to vector<8x8xbf16>
    %c0_19 = arith.constant 0 : index
    %c0_20 = arith.constant 0 : index
    %c0_21 = arith.constant 0 : index
    %35 = vector.load %arg9[%c0_19, %c0_20, %c0_21] : memref<4x8x32xbf16, #tpu.memory_space<vmem>>, vector<1x8x32xbf16>
    %36 = vector.shape_cast %35 : vector<1x8x32xbf16> to vector<8x32xbf16>
    %cst_22 = arith.constant dense<0.000000e+00> : vector<8x32xf32>
    %37 = tpu.matmul %34, %36, %cst_22 {dimension_numbers = #tpu.dot_dimension_numbers<[1], [0], [0], [1], [0, 0, 1, 1], [], []>} : vector<8x8xbf16>, vector<8x32xbf16>, vector<8x32xf32> -> vector<8x32xf32>
    %38 = arith.addf %8, %37 : vector<8x32xf32>
    %c1 = arith.constant 1 : index
    %c0_23 = arith.constant 0 : index
    %c0_24 = arith.constant 0 : index
    %39 = vector.load %arg3[%c1, %c0_23, %c0_24] : memref<4x32x8xbf16, #tpu.memory_space<vmem>>, vector<1x32x8xbf16>
    %40 = vector.shape_cast %39 : vector<1x32x8xbf16> to vector<32x8xbf16>
    %cst_25 = arith.constant dense<0.000000e+00> : vector<8x8xf32>
    %41 = tpu.matmul %7, %40, %cst_25 {dimension_numbers = #tpu.dot_dimension_numbers<[1], [0], [0], [1], [0, 0, 1, 1], [], []>} : vector<8x32xbf16>, vector<32x8xbf16>, vector<8x8xf32> -> vector<8x8xf32>
    %c1_26 = arith.constant 1 : index
    %c0_27 = arith.constant 0 : index
    %c0_28 = arith.constant 0 : index
    %42 = vector.load %arg4[%c1_26, %c0_27, %c0_28] : memref<4x1x8xf32, #tpu.memory_space<vmem>>, vector<1x1x8xf32>
    %43 = vector.shape_cast %42 : vector<1x1x8xf32> to vector<1x8xf32>
    %44 = vector.broadcast %43 : vector<1x8xf32> to vector<8x8xf32>
    %45 = arith.addf %41, %44 : vector<8x8xf32>
    %46 = arith.truncf %45 : vector<8x8xf32> to vector<8x8xbf16>
    %c1_29 = arith.constant 1 : index
    %c0_30 = arith.constant 0 : index
    %c0_31 = arith.constant 0 : index
    %47 = vector.load %arg12[%c1_29, %c0_30, %c0_31] : memref<4x8x8xbf16, #tpu.memory_space<vmem>>, vector<1x8x8xbf16>
    %48 = vector.shape_cast %47 : vector<1x8x8xbf16> to vector<8x8xbf16>
    %c1_32 = arith.constant 1 : index
    %c0_33 = arith.constant 0 : index
    %c0_34 = arith.constant 0 : index
    %49 = vector.load %arg13[%c1_32, %c0_33, %c0_34] : memref<4x8x8xbf16, #tpu.memory_space<vmem>>, vector<1x8x8xbf16>
    %50 = vector.shape_cast %49 : vector<1x8x8xbf16> to vector<8x8xbf16>
    %cst_35 = arith.constant dense<0.000000e+00> : vector<8x8xf32>
    %51 = tpu.matmul %46, %48, %cst_35 {dimension_numbers = #tpu.dot_dimension_numbers<[1], [1], [0], [0], [0, 0, 1, 0], [], []>} : vector<8x8xbf16>, vector<8x8xbf16>, vector<8x8xf32> -> vector<8x8xf32>
    %cst_36 = arith.constant dense<0xFF800000> : vector<8xf32>
    %52 = vector.multi_reduction <maximumf>, %51, %cst_36 [1] : vector<8x8xf32> to vector<8xf32>
    %53 = vector.shape_cast %52 : vector<8xf32> to vector<8x1xf32>
    %54 = vector.broadcast %53 : vector<8x1xf32> to vector<8x8xf32>
    %55 = arith.subf %51, %54 : vector<8x8xf32>
    %56 = math.exp %55 : vector<8x8xf32>
    %cst_37 = arith.constant dense<0.000000e+00> : vector<8xf32>
    %57 = vector.multi_reduction <add>, %56, %cst_37 [1] : vector<8x8xf32> to vector<8xf32>
    %58 = vector.shape_cast %57 : vector<8xf32> to vector<8x1xf32>
    %59 = tpu.reciprocal %58 {approx = true} : vector<8x1xf32> -> vector<8x1xf32>
    %60 = vector.broadcast %59 : vector<8x1xf32> to vector<8x8xf32>
    %61 = arith.mulf %56, %60 : vector<8x8xf32>
    %62 = arith.truncf %61 : vector<8x8xf32> to vector<8x8xbf16>
    %cst_38 = arith.constant dense<0.000000e+00> : vector<8x8xf32>
    %63 = tpu.matmul %62, %50, %cst_38 {dimension_numbers = #tpu.dot_dimension_numbers<[1], [0], [0], [1], [0, 0, 1, 1], [], []>} : vector<8x8xbf16>, vector<8x8xbf16>, vector<8x8xf32> -> vector<8x8xf32>
    %64 = arith.truncf %63 : vector<8x8xf32> to vector<8x8xbf16>
    %c1_39 = arith.constant 1 : index
    %c0_40 = arith.constant 0 : index
    %c0_41 = arith.constant 0 : index
    %65 = vector.load %arg9[%c1_39, %c0_40, %c0_41] : memref<4x8x32xbf16, #tpu.memory_space<vmem>>, vector<1x8x32xbf16>
    %66 = vector.shape_cast %65 : vector<1x8x32xbf16> to vector<8x32xbf16>
    %cst_42 = arith.constant dense<0.000000e+00> : vector<8x32xf32>
    %67 = tpu.matmul %64, %66, %cst_42 {dimension_numbers = #tpu.dot_dimension_numbers<[1], [0], [0], [1], [0, 0, 1, 1], [], []>} : vector<8x8xbf16>, vector<8x32xbf16>, vector<8x32xf32> -> vector<8x32xf32>
    %68 = arith.addf %38, %67 : vector<8x32xf32>
    %c2 = arith.constant 2 : index
    %c0_43 = arith.constant 0 : index
    %c0_44 = arith.constant 0 : index
    %69 = vector.load %arg3[%c2, %c0_43, %c0_44] : memref<4x32x8xbf16, #tpu.memory_space<vmem>>, vector<1x32x8xbf16>
    %70 = vector.shape_cast %69 : vector<1x32x8xbf16> to vector<32x8xbf16>
    %cst_45 = arith.constant dense<0.000000e+00> : vector<8x8xf32>
    %71 = tpu.matmul %7, %70, %cst_45 {dimension_numbers = #tpu.dot_dimension_numbers<[1], [0], [0], [1], [0, 0, 1, 1], [], []>} : vector<8x32xbf16>, vector<32x8xbf16>, vector<8x8xf32> -> vector<8x8xf32>
    %c2_46 = arith.constant 2 : index
    %c0_47 = arith.constant 0 : index
    %c0_48 = arith.constant 0 : index
    %72 = vector.load %arg4[%c2_46, %c0_47, %c0_48] : memref<4x1x8xf32, #tpu.memory_space<vmem>>, vector<1x1x8xf32>
    %73 = vector.shape_cast %72 : vector<1x1x8xf32> to vector<1x8xf32>
    %74 = vector.broadcast %73 : vector<1x8xf32> to vector<8x8xf32>
    %75 = arith.addf %71, %74 : vector<8x8xf32>
    %76 = arith.truncf %75 : vector<8x8xf32> to vector<8x8xbf16>
    %c2_49 = arith.constant 2 : index
    %c0_50 = arith.constant 0 : index
    %c0_51 = arith.constant 0 : index
    %77 = vector.load %arg12[%c2_49, %c0_50, %c0_51] : memref<4x8x8xbf16, #tpu.memory_space<vmem>>, vector<1x8x8xbf16>
    %78 = vector.shape_cast %77 : vector<1x8x8xbf16> to vector<8x8xbf16>
    %c2_52 = arith.constant 2 : index
    %c0_53 = arith.constant 0 : index
    %c0_54 = arith.constant 0 : index
    %79 = vector.load %arg13[%c2_52, %c0_53, %c0_54] : memref<4x8x8xbf16, #tpu.memory_space<vmem>>, vector<1x8x8xbf16>
    %80 = vector.shape_cast %79 : vector<1x8x8xbf16> to vector<8x8xbf16>
    %cst_55 = arith.constant dense<0.000000e+00> : vector<8x8xf32>
    %81 = tpu.matmul %76, %78, %cst_55 {dimension_numbers = #tpu.dot_dimension_numbers<[1], [1], [0], [0], [0, 0, 1, 0], [], []>} : vector<8x8xbf16>, vector<8x8xbf16>, vector<8x8xf32> -> vector<8x8xf32>
    %cst_56 = arith.constant dense<0xFF800000> : vector<8xf32>
    %82 = vector.multi_reduction <maximumf>, %81, %cst_56 [1] : vector<8x8xf32> to vector<8xf32>
    %83 = vector.shape_cast %82 : vector<8xf32> to vector<8x1xf32>
    %84 = vector.broadcast %83 : vector<8x1xf32> to vector<8x8xf32>
    %85 = arith.subf %81, %84 : vector<8x8xf32>
    %86 = math.exp %85 : vector<8x8xf32>
    %cst_57 = arith.constant dense<0.000000e+00> : vector<8xf32>
    %87 = vector.multi_reduction <add>, %86, %cst_57 [1] : vector<8x8xf32> to vector<8xf32>
    %88 = vector.shape_cast %87 : vector<8xf32> to vector<8x1xf32>
    %89 = tpu.reciprocal %88 {approx = true} : vector<8x1xf32> -> vector<8x1xf32>
    %90 = vector.broadcast %89 : vector<8x1xf32> to vector<8x8xf32>
    %91 = arith.mulf %86, %90 : vector<8x8xf32>
    %92 = arith.truncf %91 : vector<8x8xf32> to vector<8x8xbf16>
    %cst_58 = arith.constant dense<0.000000e+00> : vector<8x8xf32>
    %93 = tpu.matmul %92, %80, %cst_58 {dimension_numbers = #tpu.dot_dimension_numbers<[1], [0], [0], [1], [0, 0, 1, 1], [], []>} : vector<8x8xbf16>, vector<8x8xbf16>, vector<8x8xf32> -> vector<8x8xf32>
    %94 = arith.truncf %93 : vector<8x8xf32> to vector<8x8xbf16>
    %c2_59 = arith.constant 2 : index
    %c0_60 = arith.constant 0 : index
    %c0_61 = arith.constant 0 : index
    %95 = vector.load %arg9[%c2_59, %c0_60, %c0_61] : memref<4x8x32xbf16, #tpu.memory_space<vmem>>, vector<1x8x32xbf16>
    %96 = vector.shape_cast %95 : vector<1x8x32xbf16> to vector<8x32xbf16>
    %cst_62 = arith.constant dense<0.000000e+00> : vector<8x32xf32>
    %97 = tpu.matmul %94, %96, %cst_62 {dimension_numbers = #tpu.dot_dimension_numbers<[1], [0], [0], [1], [0, 0, 1, 1], [], []>} : vector<8x8xbf16>, vector<8x32xbf16>, vector<8x32xf32> -> vector<8x32xf32>
    %98 = arith.addf %68, %97 : vector<8x32xf32>
    %c3 = arith.constant 3 : index
    %c0_63 = arith.constant 0 : index
    %c0_64 = arith.constant 0 : index
    %99 = vector.load %arg3[%c3, %c0_63, %c0_64] : memref<4x32x8xbf16, #tpu.memory_space<vmem>>, vector<1x32x8xbf16>
    %100 = vector.shape_cast %99 : vector<1x32x8xbf16> to vector<32x8xbf16>
    %cst_65 = arith.constant dense<0.000000e+00> : vector<8x8xf32>
    %101 = tpu.matmul %7, %100, %cst_65 {dimension_numbers = #tpu.dot_dimension_numbers<[1], [0], [0], [1], [0, 0, 1, 1], [], []>} : vector<8x32xbf16>, vector<32x8xbf16>, vector<8x8xf32> -> vector<8x8xf32>
    %c3_66 = arith.constant 3 : index
    %c0_67 = arith.constant 0 : index
    %c0_68 = arith.constant 0 : index
    %102 = vector.load %arg4[%c3_66, %c0_67, %c0_68] : memref<4x1x8xf32, #tpu.memory_space<vmem>>, vector<1x1x8xf32>
    %103 = vector.shape_cast %102 : vector<1x1x8xf32> to vector<1x8xf32>
    %104 = vector.broadcast %103 : vector<1x8xf32> to vector<8x8xf32>
    %105 = arith.addf %101, %104 : vector<8x8xf32>
    %106 = arith.truncf %105 : vector<8x8xf32> to vector<8x8xbf16>
    %c3_69 = arith.constant 3 : index
    %c0_70 = arith.constant 0 : index
    %c0_71 = arith.constant 0 : index
    %107 = vector.load %arg12[%c3_69, %c0_70, %c0_71] : memref<4x8x8xbf16, #tpu.memory_space<vmem>>, vector<1x8x8xbf16>
    %108 = vector.shape_cast %107 : vector<1x8x8xbf16> to vector<8x8xbf16>
    %c3_72 = arith.constant 3 : index
    %c0_73 = arith.constant 0 : index
    %c0_74 = arith.constant 0 : index
    %109 = vector.load %arg13[%c3_72, %c0_73, %c0_74] : memref<4x8x8xbf16, #tpu.memory_space<vmem>>, vector<1x8x8xbf16>
    %110 = vector.shape_cast %109 : vector<1x8x8xbf16> to vector<8x8xbf16>
    %cst_75 = arith.constant dense<0.000000e+00> : vector<8x8xf32>
    %111 = tpu.matmul %106, %108, %cst_75 {dimension_numbers = #tpu.dot_dimension_numbers<[1], [1], [0], [0], [0, 0, 1, 0], [], []>} : vector<8x8xbf16>, vector<8x8xbf16>, vector<8x8xf32> -> vector<8x8xf32>
    %cst_76 = arith.constant dense<0xFF800000> : vector<8xf32>
    %112 = vector.multi_reduction <maximumf>, %111, %cst_76 [1] : vector<8x8xf32> to vector<8xf32>
    %113 = vector.shape_cast %112 : vector<8xf32> to vector<8x1xf32>
    %114 = vector.broadcast %113 : vector<8x1xf32> to vector<8x8xf32>
    %115 = arith.subf %111, %114 : vector<8x8xf32>
    %116 = math.exp %115 : vector<8x8xf32>
    %cst_77 = arith.constant dense<0.000000e+00> : vector<8xf32>
    %117 = vector.multi_reduction <add>, %116, %cst_77 [1] : vector<8x8xf32> to vector<8xf32>
    %118 = vector.shape_cast %117 : vector<8xf32> to vector<8x1xf32>
    %119 = tpu.reciprocal %118 {approx = true} : vector<8x1xf32> -> vector<8x1xf32>
    %120 = vector.broadcast %119 : vector<8x1xf32> to vector<8x8xf32>
    %121 = arith.mulf %116, %120 : vector<8x8xf32>
    %122 = arith.truncf %121 : vector<8x8xf32> to vector<8x8xbf16>
    %cst_78 = arith.constant dense<0.000000e+00> : vector<8x8xf32>
    %123 = tpu.matmul %122, %110, %cst_78 {dimension_numbers = #tpu.dot_dimension_numbers<[1], [0], [0], [1], [0, 0, 1, 1], [], []>} : vector<8x8xbf16>, vector<8x8xbf16>, vector<8x8xf32> -> vector<8x8xf32>
    %124 = arith.truncf %123 : vector<8x8xf32> to vector<8x8xbf16>
    %c3_79 = arith.constant 3 : index
    %c0_80 = arith.constant 0 : index
    %c0_81 = arith.constant 0 : index
    %125 = vector.load %arg9[%c3_79, %c0_80, %c0_81] : memref<4x8x32xbf16, #tpu.memory_space<vmem>>, vector<1x8x32xbf16>
    %126 = vector.shape_cast %125 : vector<1x8x32xbf16> to vector<8x32xbf16>
    %cst_82 = arith.constant dense<0.000000e+00> : vector<8x32xf32>
    %127 = tpu.matmul %124, %126, %cst_82 {dimension_numbers = #tpu.dot_dimension_numbers<[1], [0], [0], [1], [0, 0, 1, 1], [], []>} : vector<8x8xbf16>, vector<8x32xbf16>, vector<8x32xf32> -> vector<8x32xf32>
    %128 = arith.addf %98, %127 : vector<8x32xf32>
    %c0_83 = arith.constant 0 : index
    %c0_84 = arith.constant 0 : index
    %129 = vector.load %arg10[%c0_83, %c0_84] : memref<1x32xf32, #tpu.memory_space<vmem>>, vector<1x32xf32>
    %130 = vector.broadcast %129 : vector<1x32xf32> to vector<8x32xf32>
    %131 = arith.addf %128, %130 : vector<8x32xf32>
    %c0_85 = arith.constant 0 : index
    %c0_86 = arith.constant 0 : index
    %c0_87 = arith.constant 0 : index
    %132 = vector.load %arg11[%c0_85, %c0_86, %c0_87] : memref<1x8x32xf32, #tpu.memory_space<vmem>>, vector<1x8x32xf32>
    %133 = vector.shape_cast %132 : vector<1x8x32xf32> to vector<8x32xf32>
    %134 = vector.shape_cast %131 : vector<8x32xf32> to vector<1x8x32xf32>
    tpu.vector_store %arg11[%c0_85, %c0_86, %c0_87], %134 {strides = array<i32>} : memref<1x8x32xf32, #tpu.memory_space<vmem>>, vector<1x8x32xf32>,
    return
  }
  func.func @transform_0(%arg0: i32, %arg1: i32) -> (i32, i32, i32) {
    %c0_i32 = arith.constant 0 : i32
    %c0_i32_0 = arith.constant 0 : i32
    %c0_i32_1 = arith.constant 0 : i32
    return %arg0, %c0_i32, %c0_i32_0 : i32, i32, i32
  }
  func.func @transform_1(%arg0: i32, %arg1: i32) -> (i32, i32, i32) {
    %c0_i32 = arith.constant 0 : i32
    %c0_i32_0 = arith.constant 0 : i32
    %c0_i32_1 = arith.constant 0 : i32
    %c0_i32_2 = arith.constant 0 : i32
    return %c0_i32, %c0_i32_0, %c0_i32_1 : i32, i32, i32
  }
  func.func @transform_2(%arg0: i32, %arg1: i32) -> (i32, i32, i32) {
    %c0_i32 = arith.constant 0 : i32
    %c0_i32_0 = arith.constant 0 : i32
    %c0_i32_1 = arith.constant 0 : i32
    %c0_i32_2 = arith.constant 0 : i32
    return %c0_i32, %c0_i32_0, %c0_i32_1 : i32, i32, i32
  }
  func.func @transform_3(%arg0: i32, %arg1: i32) -> (i32, i32, i32) {
    %c0_i32 = arith.constant 0 : i32
    %c0_i32_0 = arith.constant 0 : i32
    %c0_i32_1 = arith.constant 0 : i32
    %c0_i32_2 = arith.constant 0 : i32
    return %c0_i32, %c0_i32_0, %c0_i32_1 : i32, i32, i32
  }
  func.func @transform_4(%arg0: i32, %arg1: i32) -> (i32, i32, i32) {
    %c0_i32 = arith.constant 0 : i32
    %c0_i32_0 = arith.constant 0 : i32
    %c0_i32_1 = arith.constant 0 : i32
    %c0_i32_2 = arith.constant 0 : i32
    return %c0_i32, %c0_i32_0, %c0_i32_1 : i32, i32, i32
  }
  func.func @transform_5(%arg0: i32, %arg1: i32) -> (i32, i32, i32) {
    %c0_i32 = arith.constant 0 : i32
    %c0_i32_0 = arith.constant 0 : i32
    %c0_i32_1 = arith.constant 0 : i32
    %c0_i32_2 = arith.constant 0 : i32
    return %c0_i32, %c0_i32_0, %c0_i32_1 : i32, i32, i32
  }
  func.func @transform_6(%arg0: i32, %arg1: i32) -> (i32, i32, i32) {
    %c0_i32 = arith.constant 0 : i32
    %c0_i32_0 = arith.constant 0 : i32
    %c0_i32_1 = arith.constant 0 : i32
    %c0_i32_2 = arith.constant 0 : i32
    return %c0_i32, %c0_i32_0, %c0_i32_1 : i32, i32, i32
  }
  func.func @transform_7(%arg0: i32, %arg1: i32) -> (i32, i32, i32) {
    %c0_i32 = arith.constant 0 : i32
    %c0_i32_0 = arith.constant 0 : i32
    %c0_i32_1 = arith.constant 0 : i32
    %c0_i32_2 = arith.constant 0 : i32
    return %c0_i32, %c0_i32_0, %c0_i32_1 : i32, i32, i32
  }
  func.func @transform_8(%arg0: i32, %arg1: i32) -> (i32, i32) {
    %c0_i32 = arith.constant 0 : i32
    %c0_i32_0 = arith.constant 0 : i32
    %c0_i32_1 = arith.constant 0 : i32
    return %c0_i32, %c0_i32_0 : i32, i32
  }
  func.func @transform_9(%arg0: i32, %arg1: i32) -> (i32, i32, i32) {
    %c0_i32 = arith.constant 0 : i32
    %c0_i32_0 = arith.constant 0 : i32
    return %arg0, %arg1, %c0_i32 : i32, i32, i32
  }
}

</mosaic_0001>

<llo_original>
// kernel: tpu_custom_call.1
$region0: #{tpu_custom_call.1}
  #allocation0 [shape = 'u32[]', space=smem, size = 0x4, offset = 0x4, fixed_abs, tag = 'smem constant byte address 0x4 - core index']
  #allocation1 [shape = 'u32[144,128]{1,0:T(1,128)}', space=vmem, size = 0x12000, scoped, tag = 'internal scratch']
  #allocation2 [shape = 'bf16[4,8,8]{2,1,0:T(8,128)(2,1)}', space=vmem, size = 0x2000, scoped, tag = 'scratch operand']
  #allocation3 [shape = 'bf16[4,8,8]{2,1,0:T(8,128)(2,1)}', space=vmem, size = 0x2000, scoped, tag = 'scratch operand']
  %s0 = inlined_call_operand.vmem [shape: bf16[2,8,32], index: 0, kind: input, shape index: {}]
  %s1 = inlined_call_operand.vmem [shape: bf16[4,32,8], index: 1, kind: input, shape index: {}]
  %s2 = inlined_call_operand.vmem [shape: f32[4,1,8], index: 2, kind: input, shape index: {}]
  %s3 = inlined_call_operand.vmem [shape: bf16[4,32,8], index: 3, kind: input, shape index: {}]
  %s4 = inlined_call_operand.vmem [shape: f32[4,1,8], index: 4, kind: input, shape index: {}]
  %s5 = inlined_call_operand.vmem [shape: bf16[4,32,8], index: 5, kind: input, shape index: {}]
  %s6 = inlined_call_operand.vmem [shape: f32[4,1,8], index: 6, kind: input, shape index: {}]
  %s7 = inlined_call_operand.vmem [shape: bf16[4,8,32], index: 7, kind: input, shape index: {}]
  %s8 = inlined_call_operand.vmem [shape: f32[1,32], index: 8, kind: input, shape index: {}]
  %s9 = inlined_call_operand.hbm [shape: f32[2,8,32], index: 9, kind: output, shape index: {}]
  %s10 = sld [smem:[#allocation0]]
  $region73: #{tpu_custom_call.1} parent=0
    _
  %s12 = ssub.s32 1, %s10
  %s13 = scalar_select 0, %s12, %s10
  $region1: #{tpu_custom_call.1} parent=0
    #allocation4 [shape = 'u8[8192]{0}', space=vmem, size = 0x2000, scoped, tag = 'output window, operand 0']
    #allocation5 [shape = 's32[2]{0}', space=sflag, size = 0x8, scoped, tag = 'scoped memory for tpu_custom_call.1']
    %14 = vsyncpa [#allocation5], 0
    %s15 = scalar_lea.sflag [#allocation5], 1
    %16 = vsyncpa %s15, 0
    loop: start=0, step=1, limit=4
    $region2: #{tpu_custom_call.1} parent=1 // loop_pre_header
      _
    $region3: #{tpu_custom_call.1} parent=1 // loop_header
      %s18 = sphi 0, %s22
      %p19 = scmp.ge.s32.totalorder %s18, 4
      %s25 = sphi 0, %s37
      %s26 = sphi 0, %s33
      %s27 = sphi 0, %s25
      %s28 = sphi 0, %s26
      %s29 = sphi 0, %s27
      %s30 = sphi 0, %s28
      %s40 = sphi 0, %s42
      %s43 = sphi 0, %s40
      %s44 = sphi 0, %s43
      %s60 = sphi 0, %s44
      %s64 = sphi 0, %s64
      %s66 = sphi 0, %s64
      %s67 = sphi 0, %s66
      %s81 = sphi 0, %s67
      %s85 = sphi 0, %s85
      %s87 = sphi 0, %s85
      %s88 = sphi 0, %s87
      %s102 = sphi 0, %s88
      %s106 = sphi 0, %s106
      %s108 = sphi 0, %s106
      %s109 = sphi 0, %s108
      %s123 = sphi 0, %s109
      %s127 = sphi 0, %s127
      %s129 = sphi 0, %s127
      %s130 = sphi 0, %s129
      %s144 = sphi 0, %s130
      %s148 = sphi 0, %s148
      %s150 = sphi 0, %s148
      %s151 = sphi 0, %s150
      %s165 = sphi 0, %s151
      %s169 = sphi 0, %s169
      %s171 = sphi 0, %s169
      %s172 = sphi 0, %s171
      %s186 = sphi 0, %s172
      %s190 = sphi 0, %s190
      %s192 = sphi 0, %s190
      %s193 = sphi 0, %s192
      %s207 = sphi 0, %s193
      %s211 = sphi 0, %s211
      %s213 = sphi 0, %s211
      %s214 = sphi 0, %s213
      %s228 = sphi 0, %s214
      %s236 = sphi 0, %s238
      %s239 = sphi 0, %s236
      %s240 = sphi 0, %s239
      %s256 = sphi 0, %s240
    $region4: #{tpu_custom_call.1} parent=1 // loop_header_branch
      %21 = sbr.rel (%p19) target = $region8
    $region5: #{tpu_custom_call.1} parent=1 // loop_body
      %s23 = ssub.s32 %s18, 1
      %s24 = ssub.s32 %s18, 2
      %s31 = sadd.s32 1, %s26
      %p32 = scmp.ge.s32.totalorder %s31, 1
      %s33 = scalar_select %p32, 0, %s31
      %s34 = sadd.s32 1, %s25
      %s35 = scalar_select %p32, %s34, %s25
      %p36 = scmp.ge.s32.totalorder %s35, 2
      %s37 = scalar_select %p36, 0, %s35
      %s38 = ssub.s32 %s25, %s37
      %p39 = scmp.eq.s32.totalorder %s38, 0
      %s41 = sadd.s32 %s40, 1
      %s42 = scalar_select %p39, %s40, %s41
      %p45 = pneg %p39
      %p46 = scmp.eq.s32.totalorder %s18, 1
      %p47 = por %p45, %p46
      %p48 = scmp.ne.s32.totalorder %s40, %s43
      %p49 = scmp.eq.s32.totalorder %s18, 0
      %p50 = por %p48, %p49
      %p51 = scmp.ne.s32.totalorder %s40, %s43
      %p52 = scmp.eq.s32.totalorder %s23, 1
      %p53 = por %p51, %p52
      %p54 = scmp.ne.s32.totalorder %s43, %s44
      %p55 = scmp.eq.s32.totalorder %s23, 0
      %p56 = por %p54, %p55
      %p57 = scmp.ne.s32.totalorder %s43, %s44
      %p58 = scmp.eq.s32.totalorder %s24, 1
      %p59 = por %p57, %p58
      %p61 = scmp.ne.s32.totalorder %s44, %s60
      %p62 = scmp.eq.s32.totalorder %s24, 0
      %p63 = por %p61, %p62
      %s65 = sadd.s32 %s64, 1
      %p68 = scmp.eq.s32.totalorder %s18, 1
      %p69 = scmp.ne.s32.totalorder %s64, %s66
      %p70 = scmp.eq.s32.totalorder %s18, 0
      %p71 = por %p69, %p70
      %p72 = scmp.ne.s32.totalorder %s64, %s66
      %p73 = scmp.eq.s32.totalorder %s23, 1
      %p74 = por %p72, %p73
      %p75 = scmp.ne.s32.totalorder %s66, %s67
      %p76 = scmp.eq.s32.totalorder %s23, 0
      %p77 = por %p75, %p76
      %p78 = scmp.ne.s32.totalorder %s66, %s67
      %p79 = scmp.eq.s32.totalorder %s24, 1
      %p80 = por %p78, %p79
      %p82 = scmp.ne.s32.totalorder %s67, %s81
      %p83 = scmp.eq.s32.totalorder %s24, 0
      %p84 = por %p82, %p83
      %s86 = sadd.s32 %s85, 1
      %p89 = scmp.eq.s32.totalorder %s18, 1
      %p90 = scmp.ne.s32.totalorder %s85, %s87
      %p91 = scmp.eq.s32.totalorder %s18, 0
      %p92 = por %p90, %p91
      %p93 = scmp.ne.s32.totalorder %s85, %s87
      %p94 = scmp.eq.s32.totalorder %s23, 1
      %p95 = por %p93, %p94
      %p96 = scmp.ne.s32.totalorder %s87, %s88
      %p97 = scmp.eq.s32.totalorder %s23, 0
      %p98 = por %p96, %p97
      %p99 = scmp.ne.s32.totalorder %s87, %s88
      %p100 = scmp.eq.s32.totalorder %s24, 1
      %p101 = por %p99, %p100
      %p103 = scmp.ne.s32.totalorder %s88, %s102
      %p104 = scmp.eq.s32.totalorder %s24, 0
      %p105 = por %p103, %p104
      %s107 = sadd.s32 %s106, 1
      %p110 = scmp.eq.s32.totalorder %s18, 1
      %p111 = scmp.ne.s32.totalorder %s106, %s108
      %p112 = scmp.eq.s32.totalorder %s18, 0
      %p113 = por %p111, %p112
      %p114 = scmp.ne.s32.totalorder %s106, %s108
      %p115 = scmp.eq.s32.totalorder %s23, 1
      %p116 = por %p114, %p115
      %p117 = scmp.ne.s32.totalorder %s108, %s109
      %p118 = scmp.eq.s32.totalorder %s23, 0
      %p119 = por %p117, %p118
      %p120 = scmp.ne.s32.totalorder %s108, %s109
      %p121 = scmp.eq.s32.totalorder %s24, 1
      %p122 = por %p120, %p121
      %p124 = scmp.ne.s32.totalorder %s109, %s123
      %p125 = scmp.eq.s32.totalorder %s24, 0
      %p126 = por %p124, %p125
      %s128 = sadd.s32 %s127, 1
      %p131 = scmp.eq.s32.totalorder %s18, 1
      %p132 = scmp.ne.s32.totalorder %s127, %s129
      %p133 = scmp.eq.s32.totalorder %s18, 0
      %p134 = por %p132, %p133
      %p135 = scmp.ne.s32.totalorder %s127, %s129
      %p136 = scmp.eq.s32.totalorder %s23, 1
      %p137 = por %p135, %p136
      %p138 = scmp.ne.s32.totalorder %s129, %s130
      %p139 = scmp.eq.s32.totalorder %s23, 0
      %p140 = por %p138, %p139
      %p141 = scmp.ne.s32.totalorder %s129, %s130
      %p142 = scmp.eq.s32.totalorder %s24, 1
      %p143 = por %p141, %p142
      %p145 = scmp.ne.s32.totalorder %s130, %s144
      %p146 = scmp.eq.s32.totalorder %s24, 0
      %p147 = por %p145, %p146
      %s149 = sadd.s32 %s148, 1
      %p152 = scmp.eq.s32.totalorder %s18, 1
      %p153 = scmp.ne.s32.totalorder %s148, %s150
      %p154 = scmp.eq.s32.totalorder %s18, 0
      %p155 = por %p153, %p154
      %p156 = scmp.ne.s32.totalorder %s148, %s150
      %p157 = scmp.eq.s32.totalorder %s23, 1
      %p158 = por %p156, %p157
      %p159 = scmp.ne.s32.totalorder %s150, %s151
      %p160 = scmp.eq.s32.totalorder %s23, 0
      %p161 = por %p159, %p160
      %p162 = scmp.ne.s32.totalorder %s150, %s151
      %p163 = scmp.eq.s32.totalorder %s24, 1
      %p164 = por %p162, %p163
      %p166 = scmp.ne.s32.totalorder %s151, %s165
      %p167 = scmp.eq.s32.totalorder %s24, 0
      %p168 = por %p166, %p167
      %s170 = sadd.s32 %s169, 1
      %p173 = scmp.eq.s32.totalorder %s18, 1
      %p174 = scmp.ne.s32.totalorder %s169, %s171
      %p175 = scmp.eq.s32.totalorder %s18, 0
      %p176 = por %p174, %p175
      %p177 = scmp.ne.s32.totalorder %s169, %s171
      %p178 = scmp.eq.s32.totalorder %s23, 1
      %p179 = por %p177, %p178
      %p180 = scmp.ne.s32.totalorder %s171, %s172
      %p181 = scmp.eq.s32.totalorder %s23, 0
      %p182 = por %p180, %p181
      %p183 = scmp.ne.s32.totalorder %s171, %s172
      %p184 = scmp.eq.s32.totalorder %s24, 1
      %p185 = por %p183, %p184
      %p187 = scmp.ne.s32.totalorder %s172, %s186
      %p188 = scmp.eq.s32.totalorder %s24, 0
      %p189 = por %p187, %p188
      %s191 = sadd.s32 %s190, 1
      %p194 = scmp.eq.s32.totalorder %s18, 1
      %p195 = scmp.ne.s32.totalorder %s190, %s192
      %p196 = scmp.eq.s32.totalorder %s18, 0
      %p197 = por %p195, %p196
      %p198 = scmp.ne.s32.totalorder %s190, %s192
      %p199 = scmp.eq.s32.totalorder %s23, 1
      %p200 = por %p198, %p199
      %p201 = scmp.ne.s32.totalorder %s192, %s193
      %p202 = scmp.eq.s32.totalorder %s23, 0
      %p203 = por %p201, %p202
      %p204 = scmp.ne.s32.totalorder %s192, %s193
      %p205 = scmp.eq.s32.totalorder %s24, 1
      %p206 = por %p204, %p205
      %p208 = scmp.ne.s32.totalorder %s193, %s207
      %p209 = scmp.eq.s32.totalorder %s24, 0
      %p210 = por %p208, %p209
      %s212 = sadd.s32 %s211, 1
      %p215 = scmp.eq.s32.totalorder %s18, 1
      %p216 = scmp.ne.s32.totalorder %s211, %s213
      %p217 = scmp.eq.s32.totalorder %s18, 0
      %p218 = por %p216, %p217
      %p219 = scmp.ne.s32.totalorder %s211, %s213
      %p220 = scmp.eq.s32.totalorder %s23, 1
      %p221 = por %p219, %p220
      %p222 = scmp.ne.s32.totalorder %s213, %s214
      %p223 = scmp.eq.s32.totalorder %s23, 0
      %p224 = por %p222, %p223
      %p225 = scmp.ne.s32.totalorder %s213, %s214
      %p226 = scmp.eq.s32.totalorder %s24, 1
      %p227 = por %p225, %p226
      %p229 = scmp.ne.s32.totalorder %s214, %s228
      %p230 = scmp.eq.s32.totalorder %s24, 0
      %p231 = por %p229, %p230
      %s232 = ssub.s32 %s25, %s37
      %s233 = ssub.s32 %s26, %s33
      %s234 = sor.u32 %s232, %s233
      %p235 = scmp.eq.s32.totalorder %s234, 0
      %s237 = sadd.s32 %s236, 1
      %s238 = scalar_select %p235, %s236, %s237
      %p241 = pneg %p235
      %p242 = scmp.eq.s32.totalorder %s18, 1
      %p243 = por %p241, %p242
      %p244 = scmp.ne.s32.totalorder %s236, %s239
      %p245 = scmp.eq.s32.totalorder %s18, 0
      %p246 = por %p244, %p245
      %p247 = scmp.ne.s32.totalorder %s236, %s239
      %p248 = scmp.eq.s32.totalorder %s23, 1
      %p249 = por %p247, %p248
      %p250 = scmp.ne.s32.totalorder %s239, %s240
      %p251 = scmp.eq.s32.totalorder %s23, 0
      %p252 = por %p250, %p251
      %p253 = scmp.ne.s32.totalorder %s239, %s240
      %p254 = scmp.eq.s32.totalorder %s24, 1
      %p255 = por %p253, %p254
      %p257 = scmp.ne.s32.totalorder %s240, %s256
      %p258 = scmp.eq.s32.totalorder %s24, 0
      %p259 = por %p257, %p258
      %p260 = scmp.le.s32.totalorder 1, %s18
      %p261 = scmp.lt.s32.totalorder %s18, 3
      %p262 = pnand %p260, %p261
      %p263 = pneg %p262
      // Predicated region
      $region9: #{tpu_custom_call.1} parent=5 // pred_check
        _
      $region10: #{tpu_custom_call.1} parent=5 // pred_check_branch
        %265 = sbr.rel (%p262) target = $region12
      $region11: #{tpu_custom_call.1} parent=5 // pred_region
        %s266 = ssub.s32 %s18, 1
        // Predicated region
        $region13: #{tpu_custom_call.1} parent=11 // pred_check
          %p267 = pneg %p77
        $region14: #{tpu_custom_call.1} parent=11 // pred_check_branch
          %269 = sbr.rel (%p267) target = $region16
        $region15: #{tpu_custom_call.1} parent=11 // pred_region
          _
        $region16: #{tpu_custom_call.1} parent=11 // pred_fallthru
          _
        // Predicated region
        $region17: #{tpu_custom_call.1} parent=11 // pred_check
          %p270 = pneg %p98
        $region18: #{tpu_custom_call.1} parent=11 // pred_check_branch
          %272 = sbr.rel (%p270) target = $region20
        $region19: #{tpu_custom_call.1} parent=11 // pred_region
          _
        $region20: #{tpu_custom_call.1} parent=11 // pred_fallthru
          _
        // Predicated region
        $region21: #{tpu_custom_call.1} parent=11 // pred_check
          %p273 = pneg %p119
        $region22: #{tpu_custom_call.1} parent=11 // pred_check_branch
          %275 = sbr.rel (%p273) target = $region24
        $region23: #{tpu_custom_call.1} parent=11 // pred_region
          _
        $region24: #{tpu_custom_call.1} parent=11 // pred_fallthru
          _
        // Predicated region
        $region25: #{tpu_custom_call.1} parent=11 // pred_check
          %p276 = pneg %p140
        $region26: #{tpu_custom_call.1} parent=11 // pred_check_branch
          %278 = sbr.rel (%p276) target = $region28
        $region27: #{tpu_custom_call.1} parent=11 // pred_region
          _
        $region28: #{tpu_custom_call.1} parent=11 // pred_fallthru
          _
        // Predicated region
        $region29: #{tpu_custom_call.1} parent=11 // pred_check
          %p279 = pneg %p161
        $region30: #{tpu_custom_call.1} parent=11 // pred_check_branch
          %281 = sbr.rel (%p279) target = $region32
        $region31: #{tpu_custom_call.1} parent=11 // pred_region
          _
        $region32: #{tpu_custom_call.1} parent=11 // pred_fallthru
          _
        // Predicated region
        $region33: #{tpu_custom_call.1} parent=11 // pred_check
          %p282 = pneg %p182
        $region34: #{tpu_custom_call.1} parent=11 // pred_check_branch
          %284 = sbr.rel (%p282) target = $region36
        $region35: #{tpu_custom_call.1} parent=11 // pred_region
          _
        $region36: #{tpu_custom_call.1} parent=11 // pred_fallthru
          _
        // Predicated region
        $region37: #{tpu_custom_call.1} parent=11 // pred_check
          %p285 = pneg %p203
        $region38: #{tpu_custom_call.1} parent=11 // pred_check_branch
          %287 = sbr.rel (%p285) target = $region40
        $region39: #{tpu_custom_call.1} parent=11 // pred_region
          _
        $region40: #{tpu_custom_call.1} parent=11 // pred_fallthru
          _
        // Predicated region
        $region41: #{tpu_custom_call.1} parent=11 // pred_check
          %p288 = pneg %p224
        $region42: #{tpu_custom_call.1} parent=11 // pred_check_branch
          %290 = sbr.rel (%p288) target = $region44
        $region43: #{tpu_custom_call.1} parent=11 // pred_region
          _
        $region44: #{tpu_custom_call.1} parent=11 // pred_fallthru
          _
      $region12: #{tpu_custom_call.1} parent=5 // pred_fallthru
        _
      %p291 = scmp.lt.s32.totalorder %s18, 2
      // Predicated region
      $region45: #{tpu_custom_call.1} parent=5 // pred_check
        %p292 = pneg %p291
      $region46: #{tpu_custom_call.1} parent=5 // pred_check_branch
        %294 = sbr.rel (%p292) target = $region48
      $region47: #{tpu_custom_call.1} parent=5 // pred_region
        // Predicated region
        $region49: #{tpu_custom_call.1} parent=47 // pred_check
          %p295 = pneg %p50
        $region50: #{tpu_custom_call.1} parent=47 // pred_check_branch
          %297 = sbr.rel (%p295) target = $region52
        $region51: #{tpu_custom_call.1} parent=47 // pred_region
          %p298 = scmp.lt.s32.totalorder %s25, 1
          %s299 = scalar_select %p298, %s25, 1
          %s300 = smul.addr %s299, 4
          %s301 = scalar_lea.vmem %s0, %s300
        $region52: #{tpu_custom_call.1} parent=47 // pred_fallthru
          _
      $region48: #{tpu_custom_call.1} parent=5 // pred_fallthru
        _
      %p302 = scmp.le.s32.totalorder 1, %s18
      %p303 = scmp.lt.s32.totalorder %s18, 3
      %p304 = pnand %p302, %p303
      %p305 = pneg %p304
      // Predicated region
      $region53: #{tpu_custom_call.1} parent=5 // pred_check
        _
      $region54: #{tpu_custom_call.1} parent=5 // pred_check_branch
        %307 = sbr.rel (%p304) target = $region56
      $region55: #{tpu_custom_call.1} parent=5 // pred_region
        %s308 = ssub.s32 %s18, 1
        %p309 = scmp.lt.s32.totalorder %s27, 1
        %s310 = scalar_select %p309, %s27, 1
        %s311 = smul.addr %s310, 4
        %s312 = scalar_lea.vmem %s0, %s311
        %p313 = pneg %p56
        %p314 = pneg %p53
        %p315 = pneg %p77
        %p316 = pneg %p74
        %p317 = pneg %p98
        %p318 = pneg %p95
        %p319 = pneg %p119
        %p320 = pneg %p116
        %p321 = pneg %p140
        %p322 = pneg %p137
        %p323 = pneg %p161
        %p324 = pneg %p158
        %p325 = pneg %p182
        %p326 = pneg %p179
        %p327 = pneg %p203
        %p328 = pneg %p200
        %p329 = pneg %p224
        %p330 = pneg %p221
        %p331 = pneg %p252
        %p332 = pneg %p249
        %s333 = sand.u32 %s239, 1
        %s334 = scalar_lea.sflag [#allocation5], %s333
        %s335 = sand.u32 %s239, 1
        %s336 = smul.addr %s335, 8
        %s337 = scalar_lea.vmem [#allocation4], %s336
        %p338 = scmp.lt.s32.totalorder %s27, 1
        %s339 = scalar_select %p338, %s27, 1
        %s340 = smul.addr %s339, 4
        %s341 = scalar_lea.vmem %s0, %s340
        %p343 = scmp.eq.s32.totalorder %s28, 0
        // Predicated region
        $region57: #{tpu_custom_call.1} parent=55 // pred_check
          %p344 = pneg %p343
        $region58: #{tpu_custom_call.1} parent=55 // pred_check_branch
          %346 = sbr.rel (%p344) target = $region60
        $region59: #{tpu_custom_call.1} parent=55 // pred_region
          %v347 = vld [vmem:[%s341] sm:$0xf]
          %v348 = vld [vmem:[%s3] sm:$0xf]
          %v349 = vld [vmem:[%s3 + $0x4] sm:$0xf]
          %v350 = vld [vmem:[%s3 + $0x8] sm:$0xf]
          %v351 = vld [vmem:[%s3 + $0xc] sm:$0xf]
          %v352 = vld [vmem:[%s4] sm:$0x1]
          %v354 = vlaneseq
          %v355 = vshrl.u32 %v354, 7
          %v356 = vsub.s32 0, %v355
          %v357 = vrot.slane %v352, %v356
          %v363 = vunpack.c.l.b16 %v348
          %v364 = vunpack.c.l.b16 %v349
          %v365 = vunpack.c.l.b16 %v350
          %v366 = vunpack.c.l.b16 %v351
          %v367 = vpack.c.b16 %v364, %v363
          %v368 = vpack.c.b16 %v366, %v365
          %vm371 = vcmask 261120
          %v373 = vsel %vm371, %v347, 0
          %375 = vmatprep.subr.bf16.mxu0 0
          %376 = vmatpush1.bf16.msra.mxu0 0
          %377 = vmatprep.subr.bf16.mxu0 0
          %378 = vmatpush1.bf16.msra.mxu0 0
          %379 = vmatprep.subr.bf16.mxu0 0
          %380 = vmatpush1.bf16.msra.mxu0 0
          %381 = vmatprep.subr.bf16.mxu0 0
          %382 = vmatpush1.bf16.msra.mxu0 0
          %383 = vmatprep.subr.bf16.mxu0 0
          %384 = vmatpush1.bf16.msra.mxu0 0
          %385 = vmatprep.subr.bf16.mxu0 0
          %386 = vmatpush1.bf16.msra.mxu0 0
          %387 = vmatprep.subr.bf16.mxu0 0
          %388 = vmatpush1.bf16.msra.mxu0 %v368
          %389 = vmatprep.subr.bf16.mxu0 0
          %390 = vmatpush1.bf16.msra.mxu0 %v367
          %391 = vmatprep.subr.bf16.mxu0 0
          %392 = vmatpush2.bf16.msra.mxu0 0
          %393 = vmatprep.subr.bf16.mxu0 0
          %394 = vmatpush2.bf16.msra.mxu0 0
          %395 = vmatprep.subr.bf16.mxu0 0
          %396 = vmatpush2.bf16.msra.mxu0 0
          %397 = vmatprep.subr.bf16.mxu0 0
          %398 = vmatpush2.bf16.msra.mxu0 0
          %399 = vmatprep.subr.bf16.mxu0 0
          %400 = vmatpush2.bf16.msra.mxu0 0
          %401 = vmatprep.subr.bf16.mxu0 0
          %402 = vmatpush2.bf16.msra.mxu0 0
          %403 = vmatprep.subr.bf16.mxu0 0
          %404 = vmatpush2.bf16.msra.mxu0 0
          %405 = vmatprep.subr.bf16.mxu0 0
          %406 = vmatpush2.bf16.msra.mxu0 0
          %407 = vmatprep.mubr.bf16.mxu0 0
          %408 = vmatmul.mubr.bf16.gmra.mxu0 %v373
          %v409 = vpop.f32.mrf.mxu0
          %v410 = vadd.f32 %v357, %v409
          %v411 = vpop.f32.mrf.mxu0
          %v412 = vpop.f32.mrf.mxu0
          %v413 = vpop.f32.mrf.mxu0
          %414 = vdwg.mxu0
          %v415 = vld [vmem:[%s5] sm:$0xf]
          %v416 = vld [vmem:[%s5 + $0x4] sm:$0xf]
          %v417 = vld [vmem:[%s5 + $0x8] sm:$0xf]
          %v418 = vld [vmem:[%s5 + $0xc] sm:$0xf]
          %v419 = vld [vmem:[%s6] sm:$0x1]
          %v421 = vlaneseq
          %v422 = vshrl.u32 %v421, 7
          %v423 = vsub.s32 0, %v422
          %v424 = vrot.slane %v419, %v423
          %v430 = vunpack.c.l.b16 %v415
          %v431 = vunpack.c.l.b16 %v416
          %v432 = vunpack.c.l.b16 %v417
          %v433 = vunpack.c.l.b16 %v418
          %v434 = vpack.c.b16 %v431, %v430
          %v435 = vpack.c.b16 %v433, %v432
          %438 = vmatprep.subr.bf16.mxu0 0
          %439 = vmatpush1.bf16.msra.mxu0 0
          %440 = vmatprep.subr.bf16.mxu0 0
          %441 = vmatpush1.bf16.msra.mxu0 0
          %442 = vmatprep.subr.bf16.mxu0 0
          %443 = vmatpush1.bf16.msra.mxu0 0
          %444 = vmatprep.subr.bf16.mxu0 0
          %445 = vmatpush1.bf16.msra.mxu0 0
          %446 = vmatprep.subr.bf16.mxu0 0
          %447 = vmatpush1.bf16.msra.mxu0 0
          %448 = vmatprep.subr.bf16.mxu0 0
          %449 = vmatpush1.bf16.msra.mxu0 0
          %450 = vmatprep.subr.bf16.mxu0 0
          %451 = vmatpush1.bf16.msra.mxu0 %v435
          %452 = vmatprep.subr.bf16.mxu0 0
          %453 = vmatpush1.bf16.msra.mxu0 %v434
          %454 = vmatprep.subr.bf16.mxu0 0
          %455 = vmatpush2.bf16.msra.mxu0 0
          %456 = vmatprep.subr.bf16.mxu0 0
          %457 = vmatpush2.bf16.msra.mxu0 0
          %458 = vmatprep.subr.bf16.mxu0 0
          %459 = vmatpush2.bf16.msra.mxu0 0
          %460 = vmatprep.subr.bf16.mxu0 0
          %461 = vmatpush2.bf16.msra.mxu0 0
          %462 = vmatprep.subr.bf16.mxu0 0
          %463 = vmatpush2.bf16.msra.mxu0 0
          %464 = vmatprep.subr.bf16.mxu0 0
          %465 = vmatpush2.bf16.msra.mxu0 0
          %466 = vmatprep.subr.bf16.mxu0 0
          %467 = vmatpush2.bf16.msra.mxu0 0
          %468 = vmatprep.subr.bf16.mxu0 0
          %469 = vmatpush2.bf16.msra.mxu0 0
          %470 = vmatprep.mubr.bf16.mxu0 0
          %471 = vmatmul.mubr.bf16.gmra.mxu0 %v373
          %v472 = vpop.f32.mrf.mxu0
          %v473 = vadd.f32 %v424, %v472
          %v474 = vpop.f32.mrf.mxu0
          %v475 = vpop.f32.mrf.mxu0
          %v476 = vpop.f32.mrf.mxu0
          %477 = vdwg.mxu0
          %v478 = vpack.c.bf16 %v410, %v410
          %vm479 = vcmask 60416
          %480 = vst.msk [vmem:[#allocation2] sm:$0xf] %vm479, %v478
          %v481 = vpack.c.bf16 %v473, %v473
          %482 = vst.msk [vmem:[#allocation3] sm:$0xf] %vm479, %v481
          %s483 = scalar_lea.vmem %s3, 16
          %v484 = vld [vmem:[%s483] sm:$0xf]
          %v485 = vld [vmem:[%s483 + $0x4] sm:$0xf]
          %v486 = vld [vmem:[%s483 + $0x8] sm:$0xf]
          %v487 = vld [vmem:[%s483 + $0xc] sm:$0xf]
          %s488 = scalar_lea.vmem %s4, 1
          %v489 = vld [vmem:[%s488] sm:$0x1]
          %v491 = vlaneseq
          %v492 = vshrl.u32 %v491, 7
          %v493 = vsub.s32 0, %v492
          %v494 = vrot.slane %v489, %v493
          %v500 = vunpack.c.l.b16 %v484
          %v501 = vunpack.c.l.b16 %v485
          %v502 = vunpack.c.l.b16 %v486
          %v503 = vunpack.c.l.b16 %v487
          %v504 = vpack.c.b16 %v501, %v500
          %v505 = vpack.c.b16 %v503, %v502
          %508 = vmatprep.subr.bf16.mxu0 0
          %509 = vmatpush1.bf16.msra.mxu0 0
          %510 = vmatprep.subr.bf16.mxu0 0
          %511 = vmatpush1.bf16.msra.mxu0 0
          %512 = vmatprep.subr.bf16.mxu0 0
          %513 = vmatpush1.bf16.msra.mxu0 0
          %514 = vmatprep.subr.bf16.mxu0 0
          %515 = vmatpush1.bf16.msra.mxu0 0
          %516 = vmatprep.subr.bf16.mxu0 0
          %517 = vmatpush1.bf16.msra.mxu0 0
          %518 = vmatprep.subr.bf16.mxu0 0
          %519 = vmatpush1.bf16.msra.mxu0 0
          %520 = vmatprep.subr.bf16.mxu0 0
          %521 = vmatpush1.bf16.msra.mxu0 %v505
          %522 = vmatprep.subr.bf16.mxu0 0
          %523 = vmatpush1.bf16.msra.mxu0 %v504
          %524 = vmatprep.subr.bf16.mxu0 0
          %525 = vmatpush2.bf16.msra.mxu0 0
          %526 = vmatprep.subr.bf16.mxu0 0
          %527 = vmatpush2.bf16.msra.mxu0 0
          %528 = vmatprep.subr.bf16.mxu0 0
          %529 = vmatpush2.bf16.msra.mxu0 0
          %530 = vmatprep.subr.bf16.mxu0 0
          %531 = vmatpush2.bf16.msra.mxu0 0
          %532 = vmatprep.subr.bf16.mxu0 0
          %533 = vmatpush2.bf16.msra.mxu0 0
          %534 = vmatprep.subr.bf16.mxu0 0
          %535 = vmatpush2.bf16.msra.mxu0 0
          %536 = vmatprep.subr.bf16.mxu0 0
          %537 = vmatpush2.bf16.msra.mxu0 0
          %538 = vmatprep.subr.bf16.mxu0 0
          %539 = vmatpush2.bf16.msra.mxu0 0
          %540 = vmatprep.mubr.bf16.mxu0 0
          %541 = vmatmul.mubr.bf16.gmra.mxu0 %v373
          %v542 = vpop.f32.mrf.mxu0
          %v543 = vadd.f32 %v494, %v542
          %v544 = vpop.f32.mrf.mxu0
          %v545 = vpop.f32.mrf.mxu0
          %v546 = vpop.f32.mrf.mxu0
          %547 = vdwg.mxu0
          %s548 = scalar_lea.vmem %s5, 16
          %v549 = vld [vmem:[%s548] sm:$0xf]
          %v550 = vld [vmem:[%s548 + $0x4] sm:$0xf]
          %v551 = vld [vmem:[%s548 + $0x8] sm:$0xf]
          %v552 = vld [vmem:[%s548 + $0xc] sm:$0xf]
          %s553 = scalar_lea.vmem %s6, 1
          %v554 = vld [vmem:[%s553] sm:$0x1]
          %v556 = vlaneseq
          %v557 = vshrl.u32 %v556, 7
          %v558 = vsub.s32 0, %v557
          %v559 = vrot.slane %v554, %v558
          %v565 = vunpack.c.l.b16 %v549
          %v566 = vunpack.c.l.b16 %v550
          %v567 = vunpack.c.l.b16 %v551
          %v568 = vunpack.c.l.b16 %v552
          %v569 = vpack.c.b16 %v566, %v565
          %v570 = vpack.c.b16 %v568, %v567
          %573 = vmatprep.subr.bf16.mxu0 0
          %574 = vmatpush1.bf16.msra.mxu0 0
          %575 = vmatprep.subr.bf16.mxu0 0
          %576 = vmatpush1.bf16.msra.mxu0 0
          %577 = vmatprep.subr.bf16.mxu0 0
          %578 = vmatpush1.bf16.msra.mxu0 0
          %579 = vmatprep.subr.bf16.mxu0 0
          %580 = vmatpush1.bf16.msra.mxu0 0
          %581 = vmatprep.subr.bf16.mxu0 0
          %582 = vmatpush1.bf16.msra.mxu0 0
          %583 = vmatprep.subr.bf16.mxu0 0
          %584 = vmatpush1.bf16.msra.mxu0 0
          %585 = vmatprep.subr.bf16.mxu0 0
          %586 = vmatpush1.bf16.msra.mxu0 %v570
          %587 = vmatprep.subr.bf16.mxu0 0
          %588 = vmatpush1.bf16.msra.mxu0 %v569
          %589 = vmatprep.subr.bf16.mxu0 0
          %590 = vmatpush2.bf16.msra.mxu0 0
          %591 = vmatprep.subr.bf16.mxu0 0
          %592 = vmatpush2.bf16.msra.mxu0 0
          %593 = vmatprep.subr.bf16.mxu0 0
          %594 = vmatpush2.bf16.msra.mxu0 0
          %595 = vmatprep.subr.bf16.mxu0 0
          %596 = vmatpush2.bf16.msra.mxu0 0
          %597 = vmatprep.subr.bf16.mxu0 0
          %598 = vmatpush2.bf16.msra.mxu0 0
          %599 = vmatprep.subr.bf16.mxu0 0
          %600 = vmatpush2.bf16.msra.mxu0 0
          %601 = vmatprep.subr.bf16.mxu0 0
          %602 = vmatpush2.bf16.msra.mxu0 0
          %603 = vmatprep.subr.bf16.mxu0 0
          %604 = vmatpush2.bf16.msra.mxu0 0
          %605 = vmatprep.mubr.bf16.mxu0 0
          %606 = vmatmul.mubr.bf16.gmra.mxu0 %v373
          %v607 = vpop.f32.mrf.mxu0
          %v608 = vadd.f32 %v559, %v607
          %v609 = vpop.f32.mrf.mxu0
          %v610 = vpop.f32.mrf.mxu0
          %v611 = vpop.f32.mrf.mxu0
          %612 = vdwg.mxu0
          %v613 = vpack.c.bf16 %v543, %v543
          %s614 = scalar_lea.vmem [#allocation2], 4
          %615 = vst.msk [vmem:[%s614] sm:$0xf] %vm479, %v613
          %v616 = vpack.c.bf16 %v608, %v608
          %s617 = scalar_lea.vmem [#allocation3], 4
          %618 = vst.msk [vmem:[%s617] sm:$0xf] %vm479, %v616
          %s619 = scalar_lea.vmem %s3, 32
          %v620 = vld [vmem:[%s619] sm:$0xf]
          %v621 = vld [vmem:[%s619 + $0x4] sm:$0xf]
          %v622 = vld [vmem:[%s619 + $0x8] sm:$0xf]
          %v623 = vld [vmem:[%s619 + $0xc] sm:$0xf]
          %s624 = scalar_lea.vmem %s4, 2
          %v625 = vld [vmem:[%s624] sm:$0x1]
          %v627 = vlaneseq
          %v628 = vshrl.u32 %v627, 7
          %v629 = vsub.s32 0, %v628
          %v630 = vrot.slane %v625, %v629
          %v636 = vunpack.c.l.b16 %v620
          %v637 = vunpack.c.l.b16 %v621
          %v638 = vunpack.c.l.b16 %v622
          %v639 = vunpack.c.l.b16 %v623
          %v640 = vpack.c.b16 %v637, %v636
          %v641 = vpack.c.b16 %v639, %v638
          %644 = vmatprep.subr.bf16.mxu0 0
          %645 = vmatpush1.bf16.msra.mxu0 0
          %646 = vmatprep.subr.bf16.mxu0 0
          %647 = vmatpush1.bf16.msra.mxu0 0
          %648 = vmatprep.subr.bf16.mxu0 0
          %649 = vmatpush1.bf16.msra.mxu0 0
          %650 = vmatprep.subr.bf16.mxu0 0
          %651 = vmatpush1.bf16.msra.mxu0 0
          %652 = vmatprep.subr.bf16.mxu0 0
          %653 = vmatpush1.bf16.msra.mxu0 0
          %654 = vmatprep.subr.bf16.mxu0 0
          %655 = vmatpush1.bf16.msra.mxu0 0
          %656 = vmatprep.subr.bf16.mxu0 0
          %657 = vmatpush1.bf16.msra.mxu0 %v641
          %658 = vmatprep.subr.bf16.mxu0 0
          %659 = vmatpush1.bf16.msra.mxu0 %v640
          %660 = vmatprep.subr.bf16.mxu0 0
          %661 = vmatpush2.bf16.msra.mxu0 0
          %662 = vmatprep.subr.bf16.mxu0 0
          %663 = vmatpush2.bf16.msra.mxu0 0
          %664 = vmatprep.subr.bf16.mxu0 0
          %665 = vmatpush2.bf16.msra.mxu0 0
          %666 = vmatprep.subr.bf16.mxu0 0
          %667 = vmatpush2.bf16.msra.mxu0 0
          %668 = vmatprep.subr.bf16.mxu0 0
          %669 = vmatpush2.bf16.msra.mxu0 0
          %670 = vmatprep.subr.bf16.mxu0 0
          %671 = vmatpush2.bf16.msra.mxu0 0
          %672 = vmatprep.subr.bf16.mxu0 0
          %673 = vmatpush2.bf16.msra.mxu0 0
          %674 = vmatprep.subr.bf16.mxu0 0
          %675 = vmatpush2.bf16.msra.mxu0 0
          %676 = vmatprep.mubr.bf16.mxu0 0
          %677 = vmatmul.mubr.bf16.gmra.mxu0 %v373
          %v678 = vpop.f32.mrf.mxu0
          %v679 = vadd.f32 %v630, %v678
          %v680 = vpop.f32.mrf.mxu0
          %v681 = vpop.f32.mrf.mxu0
          %v682 = vpop.f32.mrf.mxu0
          %683 = vdwg.mxu0
          %s684 = scalar_lea.vmem %s5, 32
          %v685 = vld [vmem:[%s684] sm:$0xf]
          %v686 = vld [vmem:[%s684 + $0x4] sm:$0xf]
          %v687 = vld [vmem:[%s684 + $0x8] sm:$0xf]
          %v688 = vld [vmem:[%s684 + $0xc] sm:$0xf]
          %s689 = scalar_lea.vmem %s6, 2
          %v690 = vld [vmem:[%s689] sm:$0x1]
          %v692 = vlaneseq
          %v693 = vshrl.u32 %v692, 7
          %v694 = vsub.s32 0, %v693
          %v695 = vrot.slane %v690, %v694
          %v701 = vunpack.c.l.b16 %v685
          %v702 = vunpack.c.l.b16 %v686
          %v703 = vunpack.c.l.b16 %v687
          %v704 = vunpack.c.l.b16 %v688
          %v705 = vpack.c.b16 %v702, %v701
          %v706 = vpack.c.b16 %v704, %v703
          %709 = vmatprep.subr.bf16.mxu0 0
          %710 = vmatpush1.bf16.msra.mxu0 0
          %711 = vmatprep.subr.bf16.mxu0 0
          %712 = vmatpush1.bf16.msra.mxu0 0
          %713 = vmatprep.subr.bf16.mxu0 0
          %714 = vmatpush1.bf16.msra.mxu0 0
          %715 = vmatprep.subr.bf16.mxu0 0
          %716 = vmatpush1.bf16.msra.mxu0 0
          %717 = vmatprep.subr.bf16.mxu0 0
          %718 = vmatpush1.bf16.msra.mxu0 0
          %719 = vmatprep.subr.bf16.mxu0 0
          %720 = vmatpush1.bf16.msra.mxu0 0
          %721 = vmatprep.subr.bf16.mxu0 0
          %722 = vmatpush1.bf16.msra.mxu0 %v706
          %723 = vmatprep.subr.bf16.mxu0 0
          %724 = vmatpush1.bf16.msra.mxu0 %v705
          %725 = vmatprep.subr.bf16.mxu0 0
          %726 = vmatpush2.bf16.msra.mxu0 0
          %727 = vmatprep.subr.bf16.mxu0 0
          %728 = vmatpush2.bf16.msra.mxu0 0
          %729 = vmatprep.subr.bf16.mxu0 0
          %730 = vmatpush2.bf16.msra.mxu0 0
          %731 = vmatprep.subr.bf16.mxu0 0
          %732 = vmatpush2.bf16.msra.mxu0 0
          %733 = vmatprep.subr.bf16.mxu0 0
          %734 = vmatpush2.bf16.msra.mxu0 0
          %735 = vmatprep.subr.bf16.mxu0 0
          %736 = vmatpush2.bf16.msra.mxu0 0
          %737 = vmatprep.subr.bf16.mxu0 0
          %738 = vmatpush2.bf16.msra.mxu0 0
          %739 = vmatprep.subr.bf16.mxu0 0
          %740 = vmatpush2.bf16.msra.mxu0 0
          %741 = vmatprep.mubr.bf16.mxu0 0
          %742 = vmatmul.mubr.bf16.gmra.mxu0 %v373
          %v743 = vpop.f32.mrf.mxu0
          %v744 = vadd.f32 %v695, %v743
          %v745 = vpop.f32.mrf.mxu0
          %v746 = vpop.f32.mrf.mxu0
          %v747 = vpop.f32.mrf.mxu0
          %748 = vdwg.mxu0
          %v749 = vpack.c.bf16 %v679, %v679
          %s750 = scalar_lea.vmem [#allocation2], 8
          %751 = vst.msk [vmem:[%s750] sm:$0xf] %vm479, %v749
          %v752 = vpack.c.bf16 %v744, %v744
          %s753 = scalar_lea.vmem [#allocation3], 8
          %754 = vst.msk [vmem:[%s753] sm:$0xf] %vm479, %v752
          %s755 = scalar_lea.vmem %s3, 48
          %v756 = vld [vmem:[%s755] sm:$0xf]
          %v757 = vld [vmem:[%s755 + $0x4] sm:$0xf]
          %v758 = vld [vmem:[%s755 + $0x8] sm:$0xf]
          %v759 = vld [vmem:[%s755 + $0xc] sm:$0xf]
          %s760 = scalar_lea.vmem %s4, 3
          %v761 = vld [vmem:[%s760] sm:$0x1]
          %v763 = vlaneseq
          %v764 = vshrl.u32 %v763, 7
          %v765 = vsub.s32 0, %v764
          %v766 = vrot.slane %v761, %v765
          %v772 = vunpack.c.l.b16 %v756
          %v773 = vunpack.c.l.b16 %v757
          %v774 = vunpack.c.l.b16 %v758
          %v775 = vunpack.c.l.b16 %v759
          %v776 = vpack.c.b16 %v773, %v772
          %v777 = vpack.c.b16 %v775, %v774
          %780 = vmatprep.subr.bf16.mxu0 0
          %781 = vmatpush1.bf16.msra.mxu0 0
          %782 = vmatprep.subr.bf16.mxu0 0
          %783 = vmatpush1.bf16.msra.mxu0 0
          %784 = vmatprep.subr.bf16.mxu0 0
          %785 = vmatpush1.bf16.msra.mxu0 0
          %786 = vmatprep.subr.bf16.mxu0 0
          %787 = vmatpush1.bf16.msra.mxu0 0
          %788 = vmatprep.subr.bf16.mxu0 0
          %789 = vmatpush1.bf16.msra.mxu0 0
          %790 = vmatprep.subr.bf16.mxu0 0
          %791 = vmatpush1.bf16.msra.mxu0 0
          %792 = vmatprep.subr.bf16.mxu0 0
          %793 = vmatpush1.bf16.msra.mxu0 %v777
          %794 = vmatprep.subr.bf16.mxu0 0
          %795 = vmatpush1.bf16.msra.mxu0 %v776
          %796 = vmatprep.subr.bf16.mxu0 0
          %797 = vmatpush2.bf16.msra.mxu0 0
          %798 = vmatprep.subr.bf16.mxu0 0
          %799 = vmatpush2.bf16.msra.mxu0 0
          %800 = vmatprep.subr.bf16.mxu0 0
          %801 = vmatpush2.bf16.msra.mxu0 0
          %802 = vmatprep.subr.bf16.mxu0 0
          %803 = vmatpush2.bf16.msra.mxu0 0
          %804 = vmatprep.subr.bf16.mxu0 0
          %805 = vmatpush2.bf16.msra.mxu0 0
          %806 = vmatprep.subr.bf16.mxu0 0
          %807 = vmatpush2.bf16.msra.mxu0 0
          %808 = vmatprep.subr.bf16.mxu0 0
          %809 = vmatpush2.bf16.msra.mxu0 0
          %810 = vmatprep.subr.bf16.mxu0 0
          %811 = vmatpush2.bf16.msra.mxu0 0
          %812 = vmatprep.mubr.bf16.mxu0 0
          %813 = vmatmul.mubr.bf16.gmra.mxu0 %v373
          %v814 = vpop.f32.mrf.mxu0
          %v815 = vadd.f32 %v766, %v814
          %v816 = vpop.f32.mrf.mxu0
          %v817 = vpop.f32.mrf.mxu0
          %v818 = vpop.f32.mrf.mxu0
          %819 = vdwg.mxu0
          %s820 = scalar_lea.vmem %s5, 48
          %v821 = vld [vmem:[%s820] sm:$0xf]
          %v822 = vld [vmem:[%s820 + $0x4] sm:$0xf]
          %v823 = vld [vmem:[%s820 + $0x8] sm:$0xf]
          %v824 = vld [vmem:[%s820 + $0xc] sm:$0xf]
          %s825 = scalar_lea.vmem %s6, 3
          %v826 = vld [vmem:[%s825] sm:$0x1]
          %v828 = vlaneseq
          %v829 = vshrl.u32 %v828, 7
          %v830 = vsub.s32 0, %v829
          %v831 = vrot.slane %v826, %v830
          %v837 = vunpack.c.l.b16 %v821
          %v838 = vunpack.c.l.b16 %v822
          %v839 = vunpack.c.l.b16 %v823
          %v840 = vunpack.c.l.b16 %v824
          %v841 = vpack.c.b16 %v838, %v837
          %v842 = vpack.c.b16 %v840, %v839
          %845 = vmatprep.subr.bf16.mxu0 0
          %846 = vmatpush1.bf16.msra.mxu0 0
          %847 = vmatprep.subr.bf16.mxu0 0
          %848 = vmatpush1.bf16.msra.mxu0 0
          %849 = vmatprep.subr.bf16.mxu0 0
          %850 = vmatpush1.bf16.msra.mxu0 0
          %851 = vmatprep.subr.bf16.mxu0 0
          %852 = vmatpush1.bf16.msra.mxu0 0
          %853 = vmatprep.subr.bf16.mxu0 0
          %854 = vmatpush1.bf16.msra.mxu0 0
          %855 = vmatprep.subr.bf16.mxu0 0
          %856 = vmatpush1.bf16.msra.mxu0 0
          %857 = vmatprep.subr.bf16.mxu0 0
          %858 = vmatpush1.bf16.msra.mxu0 %v842
          %859 = vmatprep.subr.bf16.mxu0 0
          %860 = vmatpush1.bf16.msra.mxu0 %v841
          %861 = vmatprep.subr.bf16.mxu0 0
          %862 = vmatpush2.bf16.msra.mxu0 0
          %863 = vmatprep.subr.bf16.mxu0 0
          %864 = vmatpush2.bf16.msra.mxu0 0
          %865 = vmatprep.subr.bf16.mxu0 0
          %866 = vmatpush2.bf16.msra.mxu0 0
          %867 = vmatprep.subr.bf16.mxu0 0
          %868 = vmatpush2.bf16.msra.mxu0 0
          %869 = vmatprep.subr.bf16.mxu0 0
          %870 = vmatpush2.bf16.msra.mxu0 0
          %871 = vmatprep.subr.bf16.mxu0 0
          %872 = vmatpush2.bf16.msra.mxu0 0
          %873 = vmatprep.subr.bf16.mxu0 0
          %874 = vmatpush2.bf16.msra.mxu0 0
          %875 = vmatprep.subr.bf16.mxu0 0
          %876 = vmatpush2.bf16.msra.mxu0 0
          %877 = vmatprep.mubr.bf16.mxu0 0
          %878 = vmatmul.mubr.bf16.gmra.mxu0 %v373
          %v879 = vpop.f32.mrf.mxu0
          %v880 = vadd.f32 %v831, %v879
          %v881 = vpop.f32.mrf.mxu0
          %v882 = vpop.f32.mrf.mxu0
          %v883 = vpop.f32.mrf.mxu0
          %884 = vdwg.mxu0
          %v885 = vpack.c.bf16 %v815, %v815
          %s886 = scalar_lea.vmem [#allocation2], 12
          %887 = vst.msk [vmem:[%s886] sm:$0xf] %vm479, %v885
          %v888 = vpack.c.bf16 %v880, %v880
          %s889 = scalar_lea.vmem [#allocation3], 12
          %890 = vst.msk [vmem:[%s889] sm:$0xf] %vm479, %v888
        $region60: #{tpu_custom_call.1} parent=55 // pred_fallthru
          _
        %s891 = smul.u32 %s28, 8
        %s892 = sshra.s32 %s891, 3
        %s893 = sand.u32 %s891, 7
        %s894 = smul.addr %s892, 4
        %s895 = scalar_lea.vmem %s341, %s894
        %v896 = vld [vmem:[%s895] sm:$0xf]
        %v897 = vld [vmem:[%s1] sm:$0xf]
        %v898 = vld [vmem:[%s1 + $0x4] sm:$0xf]
        %v899 = vld [vmem:[%s1 + $0x8] sm:$0xf]
        %v900 = vld [vmem:[%s1 + $0xc] sm:$0xf]
        %v901 = vld [vmem:[%s2] sm:$0x1]
        %v903 = vlaneseq
        %v904 = vshrl.u32 %v903, 7
        %v905 = vsub.s32 0, %v904
        %v906 = vrot.slane %v901, %v905
        %v912 = vunpack.c.l.b16 %v897
        %v913 = vunpack.c.l.b16 %v898
        %v914 = vunpack.c.l.b16 %v899
        %v915 = vunpack.c.l.b16 %v900
        %v916 = vpack.c.b16 %v913, %v912
        %v917 = vpack.c.b16 %v915, %v914
        %vm920 = vcmask 261120
        %v922 = vsel %vm920, %v896, 0
        %924 = vmatprep.subr.bf16.mxu0 0
        %925 = vmatpush1.bf16.msra.mxu0 0
        %926 = vmatprep.subr.bf16.mxu0 0
        %927 = vmatpush1.bf16.msra.mxu0 0
        %928 = vmatprep.subr.bf16.mxu0 0
        %929 = vmatpush1.bf16.msra.mxu0 0
        %930 = vmatprep.subr.bf16.mxu0 0
        %931 = vmatpush1.bf16.msra.mxu0 0
        %932 = vmatprep.subr.bf16.mxu0 0
        %933 = vmatpush1.bf16.msra.mxu0 0
        %934 = vmatprep.subr.bf16.mxu0 0
        %935 = vmatpush1.bf16.msra.mxu0 0
        %936 = vmatprep.subr.bf16.mxu0 0
        %937 = vmatpush1.bf16.msra.mxu0 %v917
        %938 = vmatprep.subr.bf16.mxu0 0
        %939 = vmatpush1.bf16.msra.mxu0 %v916
        %940 = vmatprep.subr.bf16.mxu0 0
        %941 = vmatpush2.bf16.msra.mxu0 0
        %942 = vmatprep.subr.bf16.mxu0 0
        %943 = vmatpush2.bf16.msra.mxu0 0
        %944 = vmatprep.subr.bf16.mxu0 0
        %945 = vmatpush2.bf16.msra.mxu0 0
        %946 = vmatprep.subr.bf16.mxu0 0
        %947 = vmatpush2.bf16.msra.mxu0 0
        %948 = vmatprep.subr.bf16.mxu0 0
        %949 = vmatpush2.bf16.msra.mxu0 0
        %950 = vmatprep.subr.bf16.mxu0 0
        %951 = vmatpush2.bf16.msra.mxu0 0
        %952 = vmatprep.subr.bf16.mxu0 0
        %953 = vmatpush2.bf16.msra.mxu0 0
        %954 = vmatprep.subr.bf16.mxu0 0
        %955 = vmatpush2.bf16.msra.mxu0 0
        %956 = vmatprep.mubr.bf16.mxu0 0
        %957 = vmatmul.mubr.bf16.gmra.mxu0 %v922
        %v958 = vpop.f32.mrf.mxu0
        %v959 = vadd.f32 %v906, %v958
        %v960 = vpop.f32.mrf.mxu0
        %v961 = vpop.f32.mrf.mxu0
        %v962 = vpop.f32.mrf.mxu0
        %963 = vdwg.mxu0
        %v964 = vpack.c.bf16 %v959, %v959
        %v965 = vld [vmem:[#allocation2] sm:$0xf]
        %v966 = vld [vmem:[#allocation3] sm:$0xf]
        %vm967 = vcmask 64512
        %v969 = vsel %vm967, %v964, 0
        %v972 = vsel %vm967, %v965, 0
        %974 = vmatprep.subr.bf16.mxu0 0
        %975 = vmatpush1.bf16.xpose.msra.mxu0 0
        %976 = vmatprep.subr.bf16.mxu0 0
        %977 = vmatpush1.bf16.xpose.msra.mxu0 0
        %978 = vmatprep.subr.bf16.mxu0 0
        %979 = vmatpush1.bf16.xpose.msra.mxu0 0
        %980 = vmatprep.subr.bf16.mxu0 0
        %981 = vmatpush1.bf16.xpose.msra.mxu0 0
        %982 = vmatprep.subr.bf16.mxu0 0
        %983 = vmatpush1.bf16.xpose.msra.mxu0 0
        %984 = vmatprep.subr.bf16.mxu0 0
        %985 = vmatpush1.bf16.xpose.msra.mxu0 0
        %986 = vmatprep.subr.bf16.mxu0 0
        %987 = vmatpush1.bf16.xpose.msra.mxu0 0
        %988 = vmatprep.subr.bf16.mxu0 0
        %989 = vmatpush1.bf16.xpose.msra.mxu0 %v972
        %990 = vmatprep.subr.bf16.mxu0 0
        %991 = vmatpush2.bf16.xpose.msra.mxu0 0
        %992 = vmatprep.subr.bf16.mxu0 0
        %993 = vmatpush2.bf16.xpose.msra.mxu0 0
        %994 = vmatprep.subr.bf16.mxu0 0
        %995 = vmatpush2.bf16.xpose.msra.mxu0 0
        %996 = vmatprep.subr.bf16.mxu0 0
        %997 = vmatpush2.bf16.xpose.msra.mxu0 0
        %998 = vmatprep.subr.bf16.mxu0 0
        %999 = vmatpush2.bf16.xpose.msra.mxu0 0
        %1000 = vmatprep.subr.bf16.mxu0 0
        %1001 = vmatpush2.bf16.xpose.msra.mxu0 0
        %1002 = vmatprep.subr.bf16.mxu0 0
        %1003 = vmatpush2.bf16.xpose.msra.mxu0 0
        %1004 = vmatprep.subr.bf16.mxu0 0
        %1005 = vmatpush2.bf16.xpose.msra.mxu0 0
        %1006 = vmatprep.mubr.bf16.mxu0 0
        %1007 = vmatmul.mubr.bf16.gmra.mxu0 %v969
        %v1008 = vpop.f32.mrf.mxu0
        %v1009 = vadd.f32 0.0, %v1008
        %v1010 = vpop.f32.mrf.mxu0
        %v1011 = vpop.f32.mrf.mxu0
        %v1012 = vpop.f32.mrf.mxu0
        %1013 = vdwg.mxu0
        %v1014 = vsel %vm967, %v1009, -inf
        %1015 = vmax.xlane.f32.xlu0 %v1014
        %v1016 = vpop.xlane.xlu0 %1015
        %v1017 = vsub.f32 %v1009, %v1016
        %v1018 = vmul.f32 %v1017, 1.442695
        %v1019 = vpow.pop %v1018
        %v1020 = vsel %vm967, %v1019, 0.0
        %1021 = vadd.xlane.f32.xlu0 %v1020
        %v1022 = vpop.xlane.xlu0 %1021
        %v1023 = vrcp.pop %v1022
        %v1024 = vmul.f32 %v1019, %v1023
        %v1025 = vpack.c.bf16 %v1024, %v1024
        %v1027 = vsel %vm967, %v1025, 0
        %vm1029 = vcmask 1043456
        %v1031 = vsel %vm1029, %v966, 0
        %1033 = vmatprep.subr.bf16.mxu0 0
        %1034 = vmatpush1.bf16.msra.mxu0 0
        %1035 = vmatprep.subr.bf16.mxu0 0
        %1036 = vmatpush1.bf16.msra.mxu0 0
        %1037 = vmatprep.subr.bf16.mxu0 0
        %1038 = vmatpush1.bf16.msra.mxu0 0
        %1039 = vmatprep.subr.bf16.mxu0 0
        %1040 = vmatpush1.bf16.msra.mxu0 0
        %1041 = vmatprep.subr.bf16.mxu0 0
        %1042 = vmatpush1.bf16.msra.mxu0 0
        %1043 = vmatprep.subr.bf16.mxu0 0
        %1044 = vmatpush1.bf16.msra.mxu0 0
        %1045 = vmatprep.subr.bf16.mxu0 0
        %1046 = vmatpush1.bf16.msra.mxu0 0
        %1047 = vmatprep.subr.bf16.mxu0 0
        %1048 = vmatpush1.bf16.msra.mxu0 %v1031
        %1049 = vmatprep.subr.bf16.mxu0 0
        %1050 = vmatpush2.bf16.msra.mxu0 0
        %1051 = vmatprep.subr.bf16.mxu0 0
        %1052 = vmatpush2.bf16.msra.mxu0 0
        %1053 = vmatprep.subr.bf16.mxu0 0
        %1054 = vmatpush2.bf16.msra.mxu0 0
        %1055 = vmatprep.subr.bf16.mxu0 0
        %1056 = vmatpush2.bf16.msra.mxu0 0
        %1057 = vmatprep.subr.bf16.mxu0 0
        %1058 = vmatpush2.bf16.msra.mxu0 0
        %1059 = vmatprep.subr.bf16.mxu0 0
        %1060 = vmatpush2.bf16.msra.mxu0 0
        %1061 = vmatprep.subr.bf16.mxu0 0
        %1062 = vmatpush2.bf16.msra.mxu0 0
        %1063 = vmatprep.subr.bf16.mxu0 0
        %1064 = vmatpush2.bf16.msra.mxu0 0
        %1065 = vmatprep.mubr.bf16.mxu0 0
        %1066 = vmatmul.mubr.bf16.gmra.mxu0 %v1027
        %v1067 = vpop.f32.mrf.mxu0
        %v1068 = vadd.f32 0.0, %v1067
        %v1069 = vpop.f32.mrf.mxu0
        %v1070 = vpop.f32.mrf.mxu0
        %v1071 = vpop.f32.mrf.mxu0
        %1072 = vdwg.mxu0
        %v1073 = vpack.c.bf16 %v1068, %v1068
        %v1074 = vld [vmem:[%s7] sm:$0xf]
        %s1075 = scalar_lea.vmem %s1, 16
        %v1076 = vld [vmem:[%s1075] sm:$0xf]
        %v1077 = vld [vmem:[%s1075 + $0x4] sm:$0xf]
        %v1078 = vld [vmem:[%s1075 + $0x8] sm:$0xf]
        %v1079 = vld [vmem:[%s1075 + $0xc] sm:$0xf]
        %s1080 = scalar_lea.vmem %s2, 1
        %v1081 = vld [vmem:[%s1080] sm:$0x1]
        %v1083 = vlaneseq
        %v1084 = vshrl.u32 %v1083, 7
        %v1085 = vsub.s32 0, %v1084
        %v1086 = vrot.slane %v1081, %v1085
        %v1092 = vunpack.c.l.b16 %v1076
        %v1093 = vunpack.c.l.b16 %v1077
        %v1094 = vunpack.c.l.b16 %v1078
        %v1095 = vunpack.c.l.b16 %v1079
        %v1096 = vpack.c.b16 %v1093, %v1092
        %v1097 = vpack.c.b16 %v1095, %v1094
        %1100 = vmatprep.subr.bf16.mxu0 0
        %1101 = vmatpush1.bf16.msra.mxu0 0
        %1102 = vmatprep.subr.bf16.mxu0 0
        %1103 = vmatpush1.bf16.msra.mxu0 0
        %1104 = vmatprep.subr.bf16.mxu0 0
        %1105 = vmatpush1.bf16.msra.mxu0 0
        %1106 = vmatprep.subr.bf16.mxu0 0
        %1107 = vmatpush1.bf16.msra.mxu0 0
        %1108 = vmatprep.subr.bf16.mxu0 0
        %1109 = vmatpush1.bf16.msra.mxu0 0
        %1110 = vmatprep.subr.bf16.mxu0 0
        %1111 = vmatpush1.bf16.msra.mxu0 0
        %1112 = vmatprep.subr.bf16.mxu0 0
        %1113 = vmatpush1.bf16.msra.mxu0 %v1097
        %1114 = vmatprep.subr.bf16.mxu0 0
        %1115 = vmatpush1.bf16.msra.mxu0 %v1096
        %1116 = vmatprep.subr.bf16.mxu0 0
        %1117 = vmatpush2.bf16.msra.mxu0 0
        %1118 = vmatprep.subr.bf16.mxu0 0
        %1119 = vmatpush2.bf16.msra.mxu0 0
        %1120 = vmatprep.subr.bf16.mxu0 0
        %1121 = vmatpush2.bf16.msra.mxu0 0
        %1122 = vmatprep.subr.bf16.mxu0 0
        %1123 = vmatpush2.bf16.msra.mxu0 0
        %1124 = vmatprep.subr.bf16.mxu0 0
        %1125 = vmatpush2.bf16.msra.mxu0 0
        %1126 = vmatprep.subr.bf16.mxu0 0
        %1127 = vmatpush2.bf16.msra.mxu0 0
        %1128 = vmatprep.subr.bf16.mxu0 0
        %1129 = vmatpush2.bf16.msra.mxu0 0
        %1130 = vmatprep.subr.bf16.mxu0 0
        %1131 = vmatpush2.bf16.msra.mxu0 0
        %1132 = vmatprep.mubr.bf16.mxu0 0
        %1133 = vmatmul.mubr.bf16.gmra.mxu0 %v922
        %v1134 = vpop.f32.mrf.mxu0
        %v1135 = vadd.f32 %v1086, %v1134
        %v1136 = vpop.f32.mrf.mxu0
        %v1137 = vpop.f32.mrf.mxu0
        %v1138 = vpop.f32.mrf.mxu0
        %1139 = vdwg.mxu0
        %v1140 = vpack.c.bf16 %v1135, %v1135
        %s1141 = scalar_lea.vmem [#allocation2], 4
        %v1142 = vld [vmem:[%s1141] sm:$0xf]
        %s1143 = scalar_lea.vmem [#allocation3], 4
        %v1144 = vld [vmem:[%s1143] sm:$0xf]
        %v1146 = vsel %vm967, %v1140, 0
        %v1149 = vsel %vm967, %v1142, 0
        %1151 = vmatprep.subr.bf16.mxu0 0
        %1152 = vmatpush1.bf16.xpose.msra.mxu0 0
        %1153 = vmatprep.subr.bf16.mxu0 0
        %1154 = vmatpush1.bf16.xpose.msra.mxu0 0
        %1155 = vmatprep.subr.bf16.mxu0 0
        %1156 = vmatpush1.bf16.xpose.msra.mxu0 0
        %1157 = vmatprep.subr.bf16.mxu0 0
        %1158 = vmatpush1.bf16.xpose.msra.mxu0 0
        %1159 = vmatprep.subr.bf16.mxu0 0
        %1160 = vmatpush1.bf16.xpose.msra.mxu0 0
        %1161 = vmatprep.subr.bf16.mxu0 0
        %1162 = vmatpush1.bf16.xpose.msra.mxu0 0
        %1163 = vmatprep.subr.bf16.mxu0 0
        %1164 = vmatpush1.bf16.xpose.msra.mxu0 0
        %1165 = vmatprep.subr.bf16.mxu0 0
        %1166 = vmatpush1.bf16.xpose.msra.mxu0 %v1149
        %1167 = vmatprep.subr.bf16.mxu0 0
        %1168 = vmatpush2.bf16.xpose.msra.mxu0 0
        %1169 = vmatprep.subr.bf16.mxu0 0
        %1170 = vmatpush2.bf16.xpose.msra.mxu0 0
        %1171 = vmatprep.subr.bf16.mxu0 0
        %1172 = vmatpush2.bf16.xpose.msra.mxu0 0
        %1173 = vmatprep.subr.bf16.mxu0 0
        %1174 = vmatpush2.bf16.xpose.msra.mxu0 0
        %1175 = vmatprep.subr.bf16.mxu0 0
        %1176 = vmatpush2.bf16.xpose.msra.mxu0 0
        %1177 = vmatprep.subr.bf16.mxu0 0
        %1178 = vmatpush2.bf16.xpose.msra.mxu0 0
        %1179 = vmatprep.subr.bf16.mxu0 0
        %1180 = vmatpush2.bf16.xpose.msra.mxu0 0
        %1181 = vmatprep.subr.bf16.mxu0 0
        %1182 = vmatpush2.bf16.xpose.msra.mxu0 0
        %1183 = vmatprep.mubr.bf16.mxu0 0
        %1184 = vmatmul.mubr.bf16.gmra.mxu0 %v1146
        %v1185 = vpop.f32.mrf.mxu0
        %v1186 = vadd.f32 0.0, %v1185
        %v1187 = vpop.f32.mrf.mxu0
        %v1188 = vpop.f32.mrf.mxu0
        %v1189 = vpop.f32.mrf.mxu0
        %1190 = vdwg.mxu0
        %v1191 = vsel %vm967, %v1186, -inf
        %1192 = vmax.xlane.f32.xlu0 %v1191
        %v1193 = vpop.xlane.xlu0 %1192
        %v1194 = vsub.f32 %v1186, %v1193
        %v1195 = vmul.f32 %v1194, 1.442695
        %v1196 = vpow.pop %v1195
        %v1197 = vsel %vm967, %v1196, 0.0
        %1198 = vadd.xlane.f32.xlu0 %v1197
        %v1199 = vpop.xlane.xlu0 %1198
        %v1200 = vrcp.pop %v1199
        %v1201 = vmul.f32 %v1196, %v1200
        %v1202 = vpack.c.bf16 %v1201, %v1201
        %v1204 = vsel %vm967, %v1202, 0
        %v1207 = vsel %vm1029, %v1144, 0
        %1209 = vmatprep.subr.bf16.mxu0 0
        %1210 = vmatpush1.bf16.msra.mxu0 0
        %1211 = vmatprep.subr.bf16.mxu0 0
        %1212 = vmatpush1.bf16.msra.mxu0 0
        %1213 = vmatprep.subr.bf16.mxu0 0
        %1214 = vmatpush1.bf16.msra.mxu0 0
        %1215 = vmatprep.subr.bf16.mxu0 0
        %1216 = vmatpush1.bf16.msra.mxu0 0
        %1217 = vmatprep.subr.bf16.mxu0 0
        %1218 = vmatpush1.bf16.msra.mxu0 0
        %1219 = vmatprep.subr.bf16.mxu0 0
        %1220 = vmatpush1.bf16.msra.mxu0 0
        %1221 = vmatprep.subr.bf16.mxu0 0
        %1222 = vmatpush1.bf16.msra.mxu0 0
        %1223 = vmatprep.subr.bf16.mxu0 0
        %1224 = vmatpush1.bf16.msra.mxu0 %v1207
        %1225 = vmatprep.subr.bf16.mxu0 0
        %1226 = vmatpush2.bf16.msra.mxu0 0
        %1227 = vmatprep.subr.bf16.mxu0 0
        %1228 = vmatpush2.bf16.msra.mxu0 0
        %1229 = vmatprep.subr.bf16.mxu0 0
        %1230 = vmatpush2.bf16.msra.mxu0 0
        %1231 = vmatprep.subr.bf16.mxu0 0
        %1232 = vmatpush2.bf16.msra.mxu0 0
        %1233 = vmatprep.subr.bf16.mxu0 0
        %1234 = vmatpush2.bf16.msra.mxu0 0
        %1235 = vmatprep.subr.bf16.mxu0 0
        %1236 = vmatpush2.bf16.msra.mxu0 0
        %1237 = vmatprep.subr.bf16.mxu0 0
        %1238 = vmatpush2.bf16.msra.mxu0 0
        %1239 = vmatprep.subr.bf16.mxu0 0
        %1240 = vmatpush2.bf16.msra.mxu0 0
        %1241 = vmatprep.mubr.bf16.mxu0 0
        %1242 = vmatmul.mubr.bf16.gmra.mxu0 %v1204
        %v1243 = vpop.f32.mrf.mxu0
        %v1244 = vadd.f32 0.0, %v1243
        %v1245 = vpop.f32.mrf.mxu0
        %v1246 = vpop.f32.mrf.mxu0
        %v1247 = vpop.f32.mrf.mxu0
        %1248 = vdwg.mxu0
        %v1249 = vpack.c.bf16 %v1244, %v1244
        %s1250 = scalar_lea.vmem %s7, 4
        %v1251 = vld [vmem:[%s1250] sm:$0xf]
        %v1253 = vsel %vm967, %v1249, 0
        %v1256 = vsel %vm1029, %v1251, 0
        %1258 = vmatprep.subr.bf16.mxu0 0
        %1259 = vmatpush1.bf16.msra.mxu0 0
        %1260 = vmatprep.subr.bf16.mxu0 0
        %1261 = vmatpush1.bf16.msra.mxu0 0
        %1262 = vmatprep.subr.bf16.mxu0 0
        %1263 = vmatpush1.bf16.msra.mxu0 0
        %1264 = vmatprep.subr.bf16.mxu0 0
        %1265 = vmatpush1.bf16.msra.mxu0 0
        %1266 = vmatprep.subr.bf16.mxu0 0
        %1267 = vmatpush1.bf16.msra.mxu0 0
        %1268 = vmatprep.subr.bf16.mxu0 0
        %1269 = vmatpush1.bf16.msra.mxu0 0
        %1270 = vmatprep.subr.bf16.mxu0 0
        %1271 = vmatpush1.bf16.msra.mxu0 0
        %1272 = vmatprep.subr.bf16.mxu0 0
        %1273 = vmatpush1.bf16.msra.mxu0 %v1256
        %1274 = vmatprep.subr.bf16.mxu0 0
        %1275 = vmatpush2.bf16.msra.mxu0 0
        %1276 = vmatprep.subr.bf16.mxu0 0
        %1277 = vmatpush2.bf16.msra.mxu0 0
        %1278 = vmatprep.subr.bf16.mxu0 0
        %1279 = vmatpush2.bf16.msra.mxu0 0
        %1280 = vmatprep.subr.bf16.mxu0 0
        %1281 = vmatpush2.bf16.msra.mxu0 0
        %1282 = vmatprep.subr.bf16.mxu0 0
        %1283 = vmatpush2.bf16.msra.mxu0 0
        %1284 = vmatprep.subr.bf16.mxu0 0
        %1285 = vmatpush2.bf16.msra.mxu0 0
        %1286 = vmatprep.subr.bf16.mxu0 0
        %1287 = vmatpush2.bf16.msra.mxu0 0
        %1288 = vmatprep.subr.bf16.mxu0 0
        %1289 = vmatpush2.bf16.msra.mxu0 0
        %1290 = vmatprep.mubr.bf16.mxu0 0
        %1291 = vmatmul.mubr.bf16.gmra.mxu0 %v1253
        %v1292 = vpop.f32.mrf.mxu0
        %v1293 = vadd.f32 0.0, %v1292
        %v1294 = vpop.f32.mrf.mxu0
        %v1295 = vpop.f32.mrf.mxu0
        %v1296 = vpop.f32.mrf.mxu0
        %1297 = vdwg.mxu0
        %v1299 = vsel %vm967, %v1073, 0
        %v1302 = vsel %vm1029, %v1074, 0
        %1304 = vmatprep.subr.bf16.mxu0 0
        %1305 = vmatpush1.bf16.msra.mxu0 0
        %1306 = vmatprep.subr.bf16.mxu0 0
        %1307 = vmatpush1.bf16.msra.mxu0 0
        %1308 = vmatprep.subr.bf16.mxu0 0
        %1309 = vmatpush1.bf16.msra.mxu0 0
        %1310 = vmatprep.subr.bf16.mxu0 0
        %1311 = vmatpush1.bf16.msra.mxu0 0
        %1312 = vmatprep.subr.bf16.mxu0 0
        %1313 = vmatpush1.bf16.msra.mxu0 0
        %1314 = vmatprep.subr.bf16.mxu0 0
        %1315 = vmatpush1.bf16.msra.mxu0 0
        %1316 = vmatprep.subr.bf16.mxu0 0
        %1317 = vmatpush1.bf16.msra.mxu0 0
        %1318 = vmatprep.subr.bf16.mxu0 0
        %1319 = vmatpush1.bf16.msra.mxu0 %v1302
        %1320 = vmatprep.subr.bf16.mxu0 0
        %1321 = vmatpush2.bf16.msra.mxu0 0
        %1322 = vmatprep.subr.bf16.mxu0 0
        %1323 = vmatpush2.bf16.msra.mxu0 0
        %1324 = vmatprep.subr.bf16.mxu0 0
        %1325 = vmatpush2.bf16.msra.mxu0 0
        %1326 = vmatprep.subr.bf16.mxu0 0
        %1327 = vmatpush2.bf16.msra.mxu0 0
        %1328 = vmatprep.subr.bf16.mxu0 0
        %1329 = vmatpush2.bf16.msra.mxu0 0
        %1330 = vmatprep.subr.bf16.mxu0 0
        %1331 = vmatpush2.bf16.msra.mxu0 0
        %1332 = vmatprep.subr.bf16.mxu0 0
        %1333 = vmatpush2.bf16.msra.mxu0 0
        %1334 = vmatprep.subr.bf16.mxu0 0
        %1335 = vmatpush2.bf16.msra.mxu0 0
        %1336 = vmatprep.mubr.bf16.mxu0 0
        %1337 = vmatmul.mubr.bf16.gmra.mxu0 %v1299
        %v1338 = vpop.f32.mrf.mxu0
        %v1339 = vadd.f32 %v1293, %v1338
        %v1340 = vpop.f32.mrf.mxu0
        %v1341 = vpop.f32.mrf.mxu0
        %v1342 = vpop.f32.mrf.mxu0
        %1343 = vdwg.mxu0
        %s1344 = scalar_lea.vmem %s1, 32
        %v1345 = vld [vmem:[%s1344] sm:$0xf]
        %v1346 = vld [vmem:[%s1344 + $0x4] sm:$0xf]
        %v1347 = vld [vmem:[%s1344 + $0x8] sm:$0xf]
        %v1348 = vld [vmem:[%s1344 + $0xc] sm:$0xf]
        %s1349 = scalar_lea.vmem %s2, 2
        %v1350 = vld [vmem:[%s1349] sm:$0x1]
        %v1352 = vlaneseq
        %v1353 = vshrl.u32 %v1352, 7
        %v1354 = vsub.s32 0, %v1353
        %v1355 = vrot.slane %v1350, %v1354
        %v1361 = vunpack.c.l.b16 %v1345
        %v1362 = vunpack.c.l.b16 %v1346
        %v1363 = vunpack.c.l.b16 %v1347
        %v1364 = vunpack.c.l.b16 %v1348
        %v1365 = vpack.c.b16 %v1362, %v1361
        %v1366 = vpack.c.b16 %v1364, %v1363
        %1369 = vmatprep.subr.bf16.mxu0 0
        %1370 = vmatpush1.bf16.msra.mxu0 0
        %1371 = vmatprep.subr.bf16.mxu0 0
        %1372 = vmatpush1.bf16.msra.mxu0 0
        %1373 = vmatprep.subr.bf16.mxu0 0
        %1374 = vmatpush1.bf16.msra.mxu0 0
        %1375 = vmatprep.subr.bf16.mxu0 0
        %1376 = vmatpush1.bf16.msra.mxu0 0
        %1377 = vmatprep.subr.bf16.mxu0 0
        %1378 = vmatpush1.bf16.msra.mxu0 0
        %1379 = vmatprep.subr.bf16.mxu0 0
        %1380 = vmatpush1.bf16.msra.mxu0 0
        %1381 = vmatprep.subr.bf16.mxu0 0
        %1382 = vmatpush1.bf16.msra.mxu0 %v1366
        %1383 = vmatprep.subr.bf16.mxu0 0
        %1384 = vmatpush1.bf16.msra.mxu0 %v1365
        %1385 = vmatprep.subr.bf16.mxu0 0
        %1386 = vmatpush2.bf16.msra.mxu0 0
        %1387 = vmatprep.subr.bf16.mxu0 0
        %1388 = vmatpush2.bf16.msra.mxu0 0
        %1389 = vmatprep.subr.bf16.mxu0 0
        %1390 = vmatpush2.bf16.msra.mxu0 0
        %1391 = vmatprep.subr.bf16.mxu0 0
        %1392 = vmatpush2.bf16.msra.mxu0 0
        %1393 = vmatprep.subr.bf16.mxu0 0
        %1394 = vmatpush2.bf16.msra.mxu0 0
        %1395 = vmatprep.subr.bf16.mxu0 0
        %1396 = vmatpush2.bf16.msra.mxu0 0
        %1397 = vmatprep.subr.bf16.mxu0 0
        %1398 = vmatpush2.bf16.msra.mxu0 0
        %1399 = vmatprep.subr.bf16.mxu0 0
        %1400 = vmatpush2.bf16.msra.mxu0 0
        %1401 = vmatprep.mubr.bf16.mxu0 0
        %1402 = vmatmul.mubr.bf16.gmra.mxu0 %v922
        %v1403 = vpop.f32.mrf.mxu0
        %v1404 = vadd.f32 %v1355, %v1403
        %v1405 = vpop.f32.mrf.mxu0
        %v1406 = vpop.f32.mrf.mxu0
        %v1407 = vpop.f32.mrf.mxu0
        %1408 = vdwg.mxu0
        %v1409 = vpack.c.bf16 %v1404, %v1404
        %s1410 = scalar_lea.vmem [#allocation2], 8
        %v1411 = vld [vmem:[%s1410] sm:$0xf]
        %s1412 = scalar_lea.vmem [#allocation3], 8
        %v1413 = vld [vmem:[%s1412] sm:$0xf]
        %v1415 = vsel %vm967, %v1409, 0
        %v1418 = vsel %vm967, %v1411, 0
        %1420 = vmatprep.subr.bf16.mxu0 0
        %1421 = vmatpush1.bf16.xpose.msra.mxu0 0
        %1422 = vmatprep.subr.bf16.mxu0 0
        %1423 = vmatpush1.bf16.xpose.msra.mxu0 0
        %1424 = vmatprep.subr.bf16.mxu0 0
        %1425 = vmatpush1.bf16.xpose.msra.mxu0 0
        %1426 = vmatprep.subr.bf16.mxu0 0
        %1427 = vmatpush1.bf16.xpose.msra.mxu0 0
        %1428 = vmatprep.subr.bf16.mxu0 0
        %1429 = vmatpush1.bf16.xpose.msra.mxu0 0
        %1430 = vmatprep.subr.bf16.mxu0 0
        %1431 = vmatpush1.bf16.xpose.msra.mxu0 0
        %1432 = vmatprep.subr.bf16.mxu0 0
        %1433 = vmatpush1.bf16.xpose.msra.mxu0 0
        %1434 = vmatprep.subr.bf16.mxu0 0
        %1435 = vmatpush1.bf16.xpose.msra.mxu0 %v1418
        %1436 = vmatprep.subr.bf16.mxu0 0
        %1437 = vmatpush2.bf16.xpose.msra.mxu0 0
        %1438 = vmatprep.subr.bf16.mxu0 0
        %1439 = vmatpush2.bf16.xpose.msra.mxu0 0
        %1440 = vmatprep.subr.bf16.mxu0 0
        %1441 = vmatpush2.bf16.xpose.msra.mxu0 0
        %1442 = vmatprep.subr.bf16.mxu0 0
        %1443 = vmatpush2.bf16.xpose.msra.mxu0 0
        %1444 = vmatprep.subr.bf16.mxu0 0
        %1445 = vmatpush2.bf16.xpose.msra.mxu0 0
        %1446 = vmatprep.subr.bf16.mxu0 0
        %1447 = vmatpush2.bf16.xpose.msra.mxu0 0
        %1448 = vmatprep.subr.bf16.mxu0 0
        %1449 = vmatpush2.bf16.xpose.msra.mxu0 0
        %1450 = vmatprep.subr.bf16.mxu0 0
        %1451 = vmatpush2.bf16.xpose.msra.mxu0 0
        %1452 = vmatprep.mubr.bf16.mxu0 0
        %1453 = vmatmul.mubr.bf16.gmra.mxu0 %v1415
        %v1454 = vpop.f32.mrf.mxu0
        %v1455 = vadd.f32 0.0, %v1454
        %v1456 = vpop.f32.mrf.mxu0
        %v1457 = vpop.f32.mrf.mxu0
        %v1458 = vpop.f32.mrf.mxu0
        %1459 = vdwg.mxu0
        %v1460 = vsel %vm967, %v1455, -inf
        %1461 = vmax.xlane.f32.xlu0 %v1460
        %v1462 = vpop.xlane.xlu0 %1461
        %v1463 = vsub.f32 %v1455, %v1462
        %v1464 = vmul.f32 %v1463, 1.442695
        %v1465 = vpow.pop %v1464
        %v1466 = vsel %vm967, %v1465, 0.0
        %1467 = vadd.xlane.f32.xlu0 %v1466
        %v1468 = vpop.xlane.xlu0 %1467
        %v1469 = vrcp.pop %v1468
        %v1470 = vmul.f32 %v1465, %v1469
        %v1471 = vpack.c.bf16 %v1470, %v1470
        %v1473 = vsel %vm967, %v1471, 0
        %v1476 = vsel %vm1029, %v1413, 0
        %1478 = vmatprep.subr.bf16.mxu0 0
        %1479 = vmatpush1.bf16.msra.mxu0 0
        %1480 = vmatprep.subr.bf16.mxu0 0
        %1481 = vmatpush1.bf16.msra.mxu0 0
        %1482 = vmatprep.subr.bf16.mxu0 0
        %1483 = vmatpush1.bf16.msra.mxu0 0
        %1484 = vmatprep.subr.bf16.mxu0 0
        %1485 = vmatpush1.bf16.msra.mxu0 0
        %1486 = vmatprep.subr.bf16.mxu0 0
        %1487 = vmatpush1.bf16.msra.mxu0 0
        %1488 = vmatprep.subr.bf16.mxu0 0
        %1489 = vmatpush1.bf16.msra.mxu0 0
        %1490 = vmatprep.subr.bf16.mxu0 0
        %1491 = vmatpush1.bf16.msra.mxu0 0
        %1492 = vmatprep.subr.bf16.mxu0 0
        %1493 = vmatpush1.bf16.msra.mxu0 %v1476
        %1494 = vmatprep.subr.bf16.mxu0 0
        %1495 = vmatpush2.bf16.msra.mxu0 0
        %1496 = vmatprep.subr.bf16.mxu0 0
        %1497 = vmatpush2.bf16.msra.mxu0 0
        %1498 = vmatprep.subr.bf16.mxu0 0
        %1499 = vmatpush2.bf16.msra.mxu0 0
        %1500 = vmatprep.subr.bf16.mxu0 0
        %1501 = vmatpush2.bf16.msra.mxu0 0
        %1502 = vmatprep.subr.bf16.mxu0 0
        %1503 = vmatpush2.bf16.msra.mxu0 0
        %1504 = vmatprep.subr.bf16.mxu0 0
        %1505 = vmatpush2.bf16.msra.mxu0 0
        %1506 = vmatprep.subr.bf16.mxu0 0
        %1507 = vmatpush2.bf16.msra.mxu0 0
        %1508 = vmatprep.subr.bf16.mxu0 0
        %1509 = vmatpush2.bf16.msra.mxu0 0
        %1510 = vmatprep.mubr.bf16.mxu0 0
        %1511 = vmatmul.mubr.bf16.gmra.mxu0 %v1473
        %v1512 = vpop.f32.mrf.mxu0
        %v1513 = vadd.f32 0.0, %v1512
        %v1514 = vpop.f32.mrf.mxu0
        %v1515 = vpop.f32.mrf.mxu0
        %v1516 = vpop.f32.mrf.mxu0
        %1517 = vdwg.mxu0
        %v1518 = vpack.c.bf16 %v1513, %v1513
        %s1519 = scalar_lea.vmem %s7, 8
        %v1520 = vld [vmem:[%s1519] sm:$0xf]
        %v1522 = vsel %vm967, %v1518, 0
        %v1525 = vsel %vm1029, %v1520, 0
        %1527 = vmatprep.subr.bf16.mxu0 0
        %1528 = vmatpush1.bf16.msra.mxu0 0
        %1529 = vmatprep.subr.bf16.mxu0 0
        %1530 = vmatpush1.bf16.msra.mxu0 0
        %1531 = vmatprep.subr.bf16.mxu0 0
        %1532 = vmatpush1.bf16.msra.mxu0 0
        %1533 = vmatprep.subr.bf16.mxu0 0
        %1534 = vmatpush1.bf16.msra.mxu0 0
        %1535 = vmatprep.subr.bf16.mxu0 0
        %1536 = vmatpush1.bf16.msra.mxu0 0
        %1537 = vmatprep.subr.bf16.mxu0 0
        %1538 = vmatpush1.bf16.msra.mxu0 0
        %1539 = vmatprep.subr.bf16.mxu0 0
        %1540 = vmatpush1.bf16.msra.mxu0 0
        %1541 = vmatprep.subr.bf16.mxu0 0
        %1542 = vmatpush1.bf16.msra.mxu0 %v1525
        %1543 = vmatprep.subr.bf16.mxu0 0
        %1544 = vmatpush2.bf16.msra.mxu0 0
        %1545 = vmatprep.subr.bf16.mxu0 0
        %1546 = vmatpush2.bf16.msra.mxu0 0
        %1547 = vmatprep.subr.bf16.mxu0 0
        %1548 = vmatpush2.bf16.msra.mxu0 0
        %1549 = vmatprep.subr.bf16.mxu0 0
        %1550 = vmatpush2.bf16.msra.mxu0 0
        %1551 = vmatprep.subr.bf16.mxu0 0
        %1552 = vmatpush2.bf16.msra.mxu0 0
        %1553 = vmatprep.subr.bf16.mxu0 0
        %1554 = vmatpush2.bf16.msra.mxu0 0
        %1555 = vmatprep.subr.bf16.mxu0 0
        %1556 = vmatpush2.bf16.msra.mxu0 0
        %1557 = vmatprep.subr.bf16.mxu0 0
        %1558 = vmatpush2.bf16.msra.mxu0 0
        %1559 = vmatprep.mubr.bf16.mxu0 0
        %1560 = vmatmul.mubr.bf16.gmra.mxu0 %v1522
        %v1561 = vpop.f32.mrf.mxu0
        %v1562 = vadd.f32 0.0, %v1561
        %v1563 = vpop.f32.mrf.mxu0
        %v1564 = vpop.f32.mrf.mxu0
        %v1565 = vpop.f32.mrf.mxu0
        %1566 = vdwg.mxu0
        %v1567 = vadd.f32 %v1339, %v1562
        %s1568 = scalar_lea.vmem %s1, 48
        %v1569 = vld [vmem:[%s1568] sm:$0xf]
        %v1570 = vld [vmem:[%s1568 + $0x4] sm:$0xf]
        %v1571 = vld [vmem:[%s1568 + $0x8] sm:$0xf]
        %v1572 = vld [vmem:[%s1568 + $0xc] sm:$0xf]
        %s1573 = scalar_lea.vmem %s2, 3
        %v1574 = vld [vmem:[%s1573] sm:$0x1]
        %v1576 = vlaneseq
        %v1577 = vshrl.u32 %v1576, 7
        %v1578 = vsub.s32 0, %v1577
        %v1579 = vrot.slane %v1574, %v1578
        %v1585 = vunpack.c.l.b16 %v1569
        %v1586 = vunpack.c.l.b16 %v1570
        %v1587 = vunpack.c.l.b16 %v1571
        %v1588 = vunpack.c.l.b16 %v1572
        %v1589 = vpack.c.b16 %v1586, %v1585
        %v1590 = vpack.c.b16 %v1588, %v1587
        %1593 = vmatprep.subr.bf16.mxu0 0
        %1594 = vmatpush1.bf16.msra.mxu0 0
        %1595 = vmatprep.subr.bf16.mxu0 0
        %1596 = vmatpush1.bf16.msra.mxu0 0
        %1597 = vmatprep.subr.bf16.mxu0 0
        %1598 = vmatpush1.bf16.msra.mxu0 0
        %1599 = vmatprep.subr.bf16.mxu0 0
        %1600 = vmatpush1.bf16.msra.mxu0 0
        %1601 = vmatprep.subr.bf16.mxu0 0
        %1602 = vmatpush1.bf16.msra.mxu0 0
        %1603 = vmatprep.subr.bf16.mxu0 0
        %1604 = vmatpush1.bf16.msra.mxu0 0
        %1605 = vmatprep.subr.bf16.mxu0 0
        %1606 = vmatpush1.bf16.msra.mxu0 %v1590
        %1607 = vmatprep.subr.bf16.mxu0 0
        %1608 = vmatpush1.bf16.msra.mxu0 %v1589
        %1609 = vmatprep.subr.bf16.mxu0 0
        %1610 = vmatpush2.bf16.msra.mxu0 0
        %1611 = vmatprep.subr.bf16.mxu0 0
        %1612 = vmatpush2.bf16.msra.mxu0 0
        %1613 = vmatprep.subr.bf16.mxu0 0
        %1614 = vmatpush2.bf16.msra.mxu0 0
        %1615 = vmatprep.subr.bf16.mxu0 0
        %1616 = vmatpush2.bf16.msra.mxu0 0
        %1617 = vmatprep.subr.bf16.mxu0 0
        %1618 = vmatpush2.bf16.msra.mxu0 0
        %1619 = vmatprep.subr.bf16.mxu0 0
        %1620 = vmatpush2.bf16.msra.mxu0 0
        %1621 = vmatprep.subr.bf16.mxu0 0
        %1622 = vmatpush2.bf16.msra.mxu0 0
        %1623 = vmatprep.subr.bf16.mxu0 0
        %1624 = vmatpush2.bf16.msra.mxu0 0
        %1625 = vmatprep.mubr.bf16.mxu0 0
        %1626 = vmatmul.mubr.bf16.gmra.mxu0 %v922
        %v1627 = vpop.f32.mrf.mxu0
        %v1628 = vadd.f32 %v1579, %v1627
        %v1629 = vpop.f32.mrf.mxu0
        %v1630 = vpop.f32.mrf.mxu0
        %v1631 = vpop.f32.mrf.mxu0
        %1632 = vdwg.mxu0
        %v1633 = vpack.c.bf16 %v1628, %v1628
        %s1634 = scalar_lea.vmem [#allocation2], 12
        %v1635 = vld [vmem:[%s1634] sm:$0xf]
        %s1636 = scalar_lea.vmem [#allocation3], 12
        %v1637 = vld [vmem:[%s1636] sm:$0xf]
        %v1639 = vsel %vm967, %v1633, 0
        %v1642 = vsel %vm967, %v1635, 0
        %1644 = vmatprep.subr.bf16.mxu0 0
        %1645 = vmatpush1.bf16.xpose.msra.mxu0 0
        %1646 = vmatprep.subr.bf16.mxu0 0
        %1647 = vmatpush1.bf16.xpose.msra.mxu0 0
        %1648 = vmatprep.subr.bf16.mxu0 0
        %1649 = vmatpush1.bf16.xpose.msra.mxu0 0
        %1650 = vmatprep.subr.bf16.mxu0 0
        %1651 = vmatpush1.bf16.xpose.msra.mxu0 0
        %1652 = vmatprep.subr.bf16.mxu0 0
        %1653 = vmatpush1.bf16.xpose.msra.mxu0 0
        %1654 = vmatprep.subr.bf16.mxu0 0
        %1655 = vmatpush1.bf16.xpose.msra.mxu0 0
        %1656 = vmatprep.subr.bf16.mxu0 0
        %1657 = vmatpush1.bf16.xpose.msra.mxu0 0
        %1658 = vmatprep.subr.bf16.mxu0 0
        %1659 = vmatpush1.bf16.xpose.msra.mxu0 %v1642
        %1660 = vmatprep.subr.bf16.mxu0 0
        %1661 = vmatpush2.bf16.xpose.msra.mxu0 0
        %1662 = vmatprep.subr.bf16.mxu0 0
        %1663 = vmatpush2.bf16.xpose.msra.mxu0 0
        %1664 = vmatprep.subr.bf16.mxu0 0
        %1665 = vmatpush2.bf16.xpose.msra.mxu0 0
        %1666 = vmatprep.subr.bf16.mxu0 0
        %1667 = vmatpush2.bf16.xpose.msra.mxu0 0
        %1668 = vmatprep.subr.bf16.mxu0 0
        %1669 = vmatpush2.bf16.xpose.msra.mxu0 0
        %1670 = vmatprep.subr.bf16.mxu0 0
        %1671 = vmatpush2.bf16.xpose.msra.mxu0 0
        %1672 = vmatprep.subr.bf16.mxu0 0
        %1673 = vmatpush2.bf16.xpose.msra.mxu0 0
        %1674 = vmatprep.subr.bf16.mxu0 0
        %1675 = vmatpush2.bf16.xpose.msra.mxu0 0
        %1676 = vmatprep.mubr.bf16.mxu0 0
        %1677 = vmatmul.mubr.bf16.gmra.mxu0 %v1639
        %v1678 = vpop.f32.mrf.mxu0
        %v1679 = vadd.f32 0.0, %v1678
        %v1680 = vpop.f32.mrf.mxu0
        %v1681 = vpop.f32.mrf.mxu0
        %v1682 = vpop.f32.mrf.mxu0
        %1683 = vdwg.mxu0
        %v1684 = vsel %vm967, %v1679, -inf
        %1685 = vmax.xlane.f32.xlu0 %v1684
        %v1686 = vpop.xlane.xlu0 %1685
        %v1687 = vsub.f32 %v1679, %v1686
        %v1688 = vmul.f32 %v1687, 1.442695
        %v1689 = vpow.pop %v1688
        %v1690 = vsel %vm967, %v1689, 0.0
        %1691 = vadd.xlane.f32.xlu0 %v1690
        %v1692 = vpop.xlane.xlu0 %1691
        %v1693 = vrcp.pop %v1692
        %v1694 = vmul.f32 %v1689, %v1693
        %v1695 = vpack.c.bf16 %v1694, %v1694
        %v1697 = vsel %vm967, %v1695, 0
        %v1700 = vsel %vm1029, %v1637, 0
        %1702 = vmatprep.subr.bf16.mxu0 0
        %1703 = vmatpush1.bf16.msra.mxu0 0
        %1704 = vmatprep.subr.bf16.mxu0 0
        %1705 = vmatpush1.bf16.msra.mxu0 0
        %1706 = vmatprep.subr.bf16.mxu0 0
        %1707 = vmatpush1.bf16.msra.mxu0 0
        %1708 = vmatprep.subr.bf16.mxu0 0
        %1709 = vmatpush1.bf16.msra.mxu0 0
        %1710 = vmatprep.subr.bf16.mxu0 0
        %1711 = vmatpush1.bf16.msra.mxu0 0
        %1712 = vmatprep.subr.bf16.mxu0 0
        %1713 = vmatpush1.bf16.msra.mxu0 0
        %1714 = vmatprep.subr.bf16.mxu0 0
        %1715 = vmatpush1.bf16.msra.mxu0 0
        %1716 = vmatprep.subr.bf16.mxu0 0
        %1717 = vmatpush1.bf16.msra.mxu0 %v1700
        %1718 = vmatprep.subr.bf16.mxu0 0
        %1719 = vmatpush2.bf16.msra.mxu0 0
        %1720 = vmatprep.subr.bf16.mxu0 0
        %1721 = vmatpush2.bf16.msra.mxu0 0
        %1722 = vmatprep.subr.bf16.mxu0 0
        %1723 = vmatpush2.bf16.msra.mxu0 0
        %1724 = vmatprep.subr.bf16.mxu0 0
        %1725 = vmatpush2.bf16.msra.mxu0 0
        %1726 = vmatprep.subr.bf16.mxu0 0
        %1727 = vmatpush2.bf16.msra.mxu0 0
        %1728 = vmatprep.subr.bf16.mxu0 0
        %1729 = vmatpush2.bf16.msra.mxu0 0
        %1730 = vmatprep.subr.bf16.mxu0 0
        %1731 = vmatpush2.bf16.msra.mxu0 0
        %1732 = vmatprep.subr.bf16.mxu0 0
        %1733 = vmatpush2.bf16.msra.mxu0 0
        %1734 = vmatprep.mubr.bf16.mxu0 0
        %1735 = vmatmul.mubr.bf16.gmra.mxu0 %v1697
        %v1736 = vpop.f32.mrf.mxu0
        %v1737 = vadd.f32 0.0, %v1736
        %v1738 = vpop.f32.mrf.mxu0
        %v1739 = vpop.f32.mrf.mxu0
        %v1740 = vpop.f32.mrf.mxu0
        %1741 = vdwg.mxu0
        %v1742 = vpack.c.bf16 %v1737, %v1737
        %s1743 = scalar_lea.vmem %s7, 12
        %v1744 = vld [vmem:[%s1743] sm:$0xf]
        %v1746 = vsel %vm967, %v1742, 0
        %v1749 = vsel %vm1029, %v1744, 0
        %1751 = vmatprep.subr.bf16.mxu0 0
        %1752 = vmatpush1.bf16.msra.mxu0 0
        %1753 = vmatprep.subr.bf16.mxu0 0
        %1754 = vmatpush1.bf16.msra.mxu0 0
        %1755 = vmatprep.subr.bf16.mxu0 0
        %1756 = vmatpush1.bf16.msra.mxu0 0
        %1757 = vmatprep.subr.bf16.mxu0 0
        %1758 = vmatpush1.bf16.msra.mxu0 0
        %1759 = vmatprep.subr.bf16.mxu0 0
        %1760 = vmatpush1.bf16.msra.mxu0 0
        %1761 = vmatprep.subr.bf16.mxu0 0
        %1762 = vmatpush1.bf16.msra.mxu0 0
        %1763 = vmatprep.subr.bf16.mxu0 0
        %1764 = vmatpush1.bf16.msra.mxu0 0
        %1765 = vmatprep.subr.bf16.mxu0 0
        %1766 = vmatpush1.bf16.msra.mxu0 %v1749
        %1767 = vmatprep.subr.bf16.mxu0 0
        %1768 = vmatpush2.bf16.msra.mxu0 0
        %1769 = vmatprep.subr.bf16.mxu0 0
        %1770 = vmatpush2.bf16.msra.mxu0 0
        %1771 = vmatprep.subr.bf16.mxu0 0
        %1772 = vmatpush2.bf16.msra.mxu0 0
        %1773 = vmatprep.subr.bf16.mxu0 0
        %1774 = vmatpush2.bf16.msra.mxu0 0
        %1775 = vmatprep.subr.bf16.mxu0 0
        %1776 = vmatpush2.bf16.msra.mxu0 0
        %1777 = vmatprep.subr.bf16.mxu0 0
        %1778 = vmatpush2.bf16.msra.mxu0 0
        %1779 = vmatprep.subr.bf16.mxu0 0
        %1780 = vmatpush2.bf16.msra.mxu0 0
        %1781 = vmatprep.subr.bf16.mxu0 0
        %1782 = vmatpush2.bf16.msra.mxu0 0
        %1783 = vmatprep.mubr.bf16.mxu0 0
        %1784 = vmatmul.mubr.bf16.gmra.mxu0 %v1746
        %v1785 = vpop.f32.mrf.mxu0
        %v1786 = vadd.f32 0.0, %v1785
        %v1787 = vpop.f32.mrf.mxu0
        %v1788 = vpop.f32.mrf.mxu0
        %v1789 = vpop.f32.mrf.mxu0
        %1790 = vdwg.mxu0
        %v1791 = vadd.f32 %v1567, %v1786
        %v1792 = vld [vmem:[%s8] sm:$0x1]
        %v1794 = vlaneseq
        %v1795 = vshrl.u32 %v1794, 7
        %v1796 = vsub.s32 0, %v1795
        %v1797 = vrot.slane %v1792, %v1796
        %v1799 = vadd.f32 %v1791, %v1797
        %1800 = vst.msk [vmem:[%s337] sm:$0xff] %vm920, %v1799
        %s1801 = sand.u32 %s239, 1
        %s1802 = scalar_lea.sflag [#allocation5], %s1801
        %s1803 = sand.u32 %s239, 1
        %s1804 = smul.addr %s1803, 8
        %s1805 = scalar_lea.vmem [#allocation4], %s1804
        // Predicated region
        $region61: #{tpu_custom_call.1} parent=55 // pred_check
          %p1806 = pneg %p249
        $region62: #{tpu_custom_call.1} parent=55 // pred_check_branch
          %1808 = sbr.rel (%p1806) target = $region64
        $region63: #{tpu_custom_call.1} parent=55 // pred_region
          %s1810 = ssub.s32 128, 128
          %1811 = vsyncadd %s1802, %s1810
          %s1812 = sadd.s32 %s28, %s27
          %s1813 = smul.addr %s1812, 128
          %s1814 = scalar_lea.hbm %s9, %s1813
          %s1816 = sshll.u32 %s1805, 4
          %s1817 = int_to_ptr.vmem [resolvable:$true] %s1816
          %1819 = dma.vmem_to_hbm [thread:$0]  %s1817, 128, %s1814, %s1802
        $region64: #{tpu_custom_call.1} parent=55 // pred_fallthru
          _
      $region56: #{tpu_custom_call.1} parent=5 // pred_fallthru
        _
      %p1820 = scmp.le.s32.totalorder 2, %s18
      // Predicated region
      $region65: #{tpu_custom_call.1} parent=5 // pred_check
        %p1821 = pneg %p1820
      $region66: #{tpu_custom_call.1} parent=5 // pred_check_branch
        %1823 = sbr.rel (%p1821) target = $region68
      $region67: #{tpu_custom_call.1} parent=5 // pred_region
        %s1824 = ssub.s32 %s18, 2
        // Predicated region
        $region69: #{tpu_custom_call.1} parent=67 // pred_check
          %p1825 = pneg %p255
        $region70: #{tpu_custom_call.1} parent=67 // pred_check_branch
          %1827 = sbr.rel (%p1825) target = $region72
        $region71: #{tpu_custom_call.1} parent=67 // pred_region
          %s1828 = sand.u32 %s240, 1
          %s1829 = scalar_lea.sflag [#allocation5], %s1828
          %s1830 = sand.u32 %s240, 1
          %s1831 = smul.addr %s1830, 8
          %s1832 = scalar_lea.vmem [#allocation4], %s1831
          %1833 = dma.done %s1829, 128
        $region72: #{tpu_custom_call.1} parent=67 // pred_fallthru
          _
      $region68: #{tpu_custom_call.1} parent=5 // pred_fallthru
        _
    $region6: #{tpu_custom_call.1} parent=1 // loop_footer
      %s22 = sadd.s32 1, %s18
    $region7: #{tpu_custom_call.1} parent=1 // loop_footer_branch
      %17 = sbr.rel target = $region3
    $region8: #{tpu_custom_call.1} parent=1 // loop_exit
      _
    %1834 = vsyncpa [#allocation5], 1
    %s1835 = scalar_lea.sflag [#allocation5], 1
    %1836 = vsyncpa %s1835, 1

</llo_original>
